<compile_context>
chip_gen: v7x
topology: tpu7x:2x2x1
jax: 0.10.0
libtpu: 0.0.40
codegen_flags: <defaults>
</compile_context>

<pallas_src>
import functools
import math

import numpy as np
import jax
import jax.numpy as jnp
from jax.experimental import pallas as pl
from jax.experimental.pallas import tpu as pltpu

BN_EPS = 1e-5
EXPANSION = 4
VMEM_LIMIT = 48 * 1024 * 1024          # > v5e's 16 MiB scoped default, < v7x 64 MiB


def _round_up(x, m):
    return (x + m - 1) // m * m


def _pick_tile(d, unit, cap):
    """Pad d to a multiple of `unit`; largest tile <= cap that divides it."""
    dp = _round_up(d, unit)
    best, t = unit, unit
    while t <= min(cap, dp):
        if dp % t == 0:
            best = t
        t += unit
    return dp, best


def _pick_k(K):
    """(Kp, TK): K padded to a multiple of 128; one K-step whenever Kp<=1024,
    else the largest multiple-of-128 divisor of Kp that is <=1024."""
    Kp = _round_up(K, 128)
    if Kp <= 1024:
        return Kp, Kp
    tk, t = 128, 128
    while t <= 1024:
        if Kp % t == 0:
            tk = t
        t += 128
    return Kp, tk


# ---------------------------- Pallas kernels ----------------------------

def _mm_kernel(a_ref, b_ref, s_ref, c_ref, sl_ref, *rest, has_res):
    """Tiled matmul (bf16 operands, f32 accumulator) with fused per-channel
    scale/bias, optional residual add and per-channel leaky-slope ReLU
    (slope=0 -> ReLU, slope=1 -> identity) in the epilogue."""
    if has_res:
        r_ref, o_ref, acc_ref = rest
    else:
        o_ref, acc_ref = rest
        r_ref = None

    @pl.when(pl.program_id(2) == 0)
    def _init():
        acc_ref[...] = jnp.zeros_like(acc_ref)

    acc_ref[...] += jnp.dot(a_ref[...], b_ref[...],
                            preferred_element_type=jnp.float32)

    @pl.when(pl.program_id(2) == pl.num_programs(2) - 1)
    def _fin():
        y = acc_ref[...] * s_ref[...] + c_ref[...]
        if has_res:
            y = y + r_ref[...].astype(jnp.float32)
        y = jnp.maximum(y, y * sl_ref[...])
        o_ref[...] = y.astype(o_ref.dtype)


def _maxn_kernel(*refs):
    o_ref = refs[-1]
    m = refs[0][...]
    for r in refs[1:-1]:
        m = jnp.maximum(m, r[...])
    o_ref[...] = m


def _bilinear_kernel(x_ref, ah_ref, awt_ref, o_ref):
    x = x_ref[0].astype(jnp.float32)
    t = jnp.dot(ah_ref[...], x, preferred_element_type=jnp.float32)
    o_ref[0] = jnp.dot(t, awt_ref[...],
                       preferred_element_type=jnp.float32).astype(o_ref.dtype)


# ---------------------------- fused matmul wrapper ----------------------------

def fused_matmul(a, pw, residual=None):
    """a: (M, K) bf16 patch matrix; pw: pre-packed conv dict.  Returns
    (M, pw['n']) bf16 = relu_mask((a @ w) * scale + bias (+ residual))."""
    M, K = a.shape
    b = pw['w']
    Kp, Np = b.shape
    n = pw['n']
    _, TK = _pick_k(Kp)
    Mp, TM = _pick_tile(M, 16, 512)
    _, TN = _pick_tile(Np, 128, 512)
    # keep >=2 parallel grid blocks when possible (v7x has 2 TensorCores)
    if Mp == TM and Np == TN and Np % 256 == 0:
        TN = Np // 2

    a_p = a
    if Kp != K or Mp != M:
        a_p = jnp.pad(a_p, ((0, Mp - M), (0, Kp - K)))

    inputs = [a_p, b, pw['s'], pw['b'], pw['slope']]
    in_specs = [
        pl.BlockSpec((TM, TK), lambda i, j, k: (i, k)),
        pl.BlockSpec((TK, TN), lambda i, j, k: (k, j)),
        pl.BlockSpec((1, TN), lambda i, j, k: (0, j)),
        pl.BlockSpec((1, TN), lambda i, j, k: (0, j)),
        pl.BlockSpec((1, TN), lambda i, j, k: (0, j)),
    ]
    has_res = residual is not None
    if has_res:
        r = residual.astype(jnp.bfloat16)
        if r.shape != (Mp, Np):
            r = jnp.pad(r, ((0, Mp - M), (0, Np - n)))
        inputs.append(r)
        in_specs.append(pl.BlockSpec((TM, TN), lambda i, j, k: (i, j)))

    grid = (Mp // TM, Np // TN, Kp // TK)
    out = pl.pallas_call(
        functools.partial(_mm_kernel, has_res=has_res),
        out_shape=jax.ShapeDtypeStruct((Mp, Np), jnp.bfloat16),
        grid_spec=pltpu.PrefetchScalarGridSpec(
            num_scalar_prefetch=0,
            grid=grid,
            in_specs=in_specs,
            out_specs=pl.BlockSpec((TM, TN), lambda i, j, k: (i, j)),
            scratch_shapes=[pltpu.VMEM((TM, TN), jnp.float32)],
        ),
        compiler_params=pltpu.CompilerParams(
            dimension_semantics=("parallel", "parallel", "arbitrary"),
            vmem_limit_bytes=VMEM_LIMIT),
    )(*inputs)
    return out[:M, :n]


# ---------------------------- conv / pool wrappers ----------------------------

def _norm_pad(pad):
    if isinstance(pad, int):
        return ((pad, pad), (pad, pad))
    return (tuple(pad[0]), tuple(pad[1]))


def _im2col(x, kh, kw, stride, pad):
    """NHWC im2col -> (N*Ho*Wo, kh*kw*C), bf16."""
    N, H, W, C = x.shape
    (pt, pb), (pleft, pright) = pad
    Ho = (H + pt + pb - kh) // stride + 1
    Wo = (W + pleft + pright - kw) // stride + 1
    xp = jnp.pad(x, ((0, 0), (pt, pb), (pleft, pright), (0, 0)))
    cols = []
    for i in range(kh):
        for j in range(kw):
            cols.append(xp[:, i:i + stride * (Ho - 1) + 1:stride,
                           j:j + stride * (Wo - 1) + 1:stride, :])
    patches = jnp.concatenate(cols, axis=-1)
    return patches.reshape(N * Ho * Wo, kh * kw * C), Ho, Wo


def conv2d_bn(x, pw, *, stride=1, pad=0, residual=None):
    """NHWC conv with pre-packed weights; BN scale/bias, residual add and
    (per-channel) ReLU fused into the matmul epilogue."""
    N, H, W, C = x.shape
    kh, kw, n = pw['kh'], pw['kw'], pw['n']
    pad = _norm_pad(pad)
    if kh == 1 and kw == 1 and pad == ((0, 0), (0, 0)):
        xs = x if stride == 1 else x[:, ::stride, ::stride, :]
        Ho, Wo = xs.shape[1], xs.shape[2]
        patches = xs.reshape(N * Ho * Wo, C)
    else:
        patches, Ho, Wo = _im2col(x, kh, kw, stride, pad)
    res2 = None
    if residual is not None:
        res2 = residual.reshape(N * Ho * Wo, n)
    y = fused_matmul(patches, pw, residual=res2)
    return y.reshape(N, Ho, Wo, n)


def maxpool_3x3_s2_p1(x):
    """nn.MaxPool2d(3, stride=2, padding=1), NHWC, gridded 9-way max."""
    N, H, W, C = x.shape
    Ho = (H + 2 - 3) // 2 + 1
    Wo = (W + 2 - 3) // 2 + 1
    xp = jnp.pad(x, ((0, 0), (1, 1), (1, 1), (0, 0)),
                 constant_values=-jnp.inf)
    slices = []
    for i in range(3):
        for j in range(3):
            s = xp[:, i:i + 2 * (Ho - 1) + 1:2, j:j + 2 * (Wo - 1) + 1:2, :]
            slices.append(s.reshape(N * Ho, Wo * C))
    R, L = N * Ho, Wo * C
    Rp, TR = _pick_tile(R, 8, 256)
    Lp, TL = _pick_tile(L, 128, 512)
    if Rp != R or Lp != L:
        slices = [jnp.pad(s, ((0, Rp - R), (0, Lp - L))) for s in slices]
    out = pl.pallas_call(
        _maxn_kernel,
        out_shape=jax.ShapeDtypeStruct((Rp, Lp), x.dtype),
        grid_spec=pltpu.PrefetchScalarGridSpec(
            num_scalar_prefetch=0,
            grid=(Rp // TR, Lp // TL),
            in_specs=[pl.BlockSpec((TR, TL), lambda i, j: (i, j))] * 9,
            out_specs=pl.BlockSpec((TR, TL), lambda i, j: (i, j)),
        ),
        compiler_params=pltpu.CompilerParams(
            dimension_semantics=("parallel", "parallel")),
    )(*slices)
    return out[:R, :L].reshape(N, Ho, Wo, C)


def _interp_matrix(out_size, in_size):
    A = np.zeros((out_size, in_size), np.float32)
    if out_size == 1 or in_size == 1:
        A[:, 0] = 1.0
        return jnp.asarray(A)
    sc = (in_size - 1) / (out_size - 1)
    for i in range(out_size):
        src = i * sc
        i0 = min(int(np.floor(src)), in_size - 1)
        i1 = min(i0 + 1, in_size - 1)
        w1 = np.float32(src - i0)
        A[i, i0] += 1.0 - w1
        A[i, i1] += w1
    return jnp.asarray(A)


def bilinear_upsample(x, out_h, out_w):
    """nn.Upsample(size, 'bilinear', align_corners=True); NHWC in, NCHW out."""
    N, H, W, C = x.shape
    Ah = _interp_matrix(out_h, H)
    AwT = _interp_matrix(out_w, W).T
    x2 = x.transpose(0, 3, 1, 2).reshape(N * C, H, W)
    out = pl.pallas_call(
        _bilinear_kernel,
        out_shape=jax.ShapeDtypeStruct((N * C, out_h, out_w), jnp.float32),
        grid_spec=pltpu.PrefetchScalarGridSpec(
            num_scalar_prefetch=0,
            grid=(N * C,),
            in_specs=[pl.BlockSpec((1, H, W), lambda i: (i, 0, 0)),
                      pl.BlockSpec((out_h, H), lambda i: (0, 0)),
                      pl.BlockSpec((W, out_w), lambda i: (0, 0))],
            out_specs=pl.BlockSpec((1, out_h, out_w), lambda i: (i, 0, 0)),
        ),
        compiler_params=pltpu.CompilerParams(
            dimension_semantics=("parallel",)),
    )(x2, Ah, AwT)
    return out.reshape(N, C, out_h, out_w)


# ---------------------------- parameters & one-time packing ----------------------------

class ParamGen:
    def __init__(self, key):
        self.key = key
        self.i = 0

    def conv(self, cout, cin, kh, kw):
        # weights_init(): normal(0, sqrt(2 / (kh*kw*cout))), bias-free convs.
        k = jax.random.fold_in(self.key, self.i)
        self.i += 1
        n = kh * kw * cout
        return (jax.random.normal(k, (cout, cin, kh, kw), jnp.float32)
                * np.float32(math.sqrt(2.0 / n)))

    def bn(self, c):
        # BN eval: gamma=1, beta=0, running_mean=0, running_var=1.
        scale = jnp.full((c,), 1.0 / math.sqrt(1.0 + BN_EPS), jnp.float32)
        bias = jnp.zeros((c,), jnp.float32)
        return scale, bias


def pack_conv(w, scale=None, bias=None, relu=False, slope=None):
    """Pack a torch-layout conv weight (Cout,Cin,kh,kw) + BN affine into the
    padded bf16 matmul layout once, at parameter-build time."""
    Cout, Cin, kh, kw = w.shape
    K = kh * kw * Cin
    Kp, _ = _pick_k(K)
    Np = _round_up(Cout, 128)
    wm = jnp.transpose(w, (2, 3, 1, 0)).reshape(K, Cout).astype(jnp.bfloat16)
    if (Kp, Np) != (K, Cout):
        wm = jnp.pad(wm, ((0, Kp - K), (0, Np - Cout)))
    if scale is None:
        scale = jnp.ones((Cout,), jnp.float32)
    if bias is None:
        bias = jnp.zeros((Cout,), jnp.float32)
    if slope is None:
        slope = (jnp.zeros((Cout,), jnp.float32) if relu
                 else jnp.ones((Cout,), jnp.float32))

    def padv(v):
        v = v.reshape(1, Cout).astype(jnp.float32)
        return jnp.pad(v, ((0, 0), (0, Np - Cout))) if Np != Cout else v

    return {'w': wm, 's': padv(scale), 'b': padv(bias), 'slope': padv(slope),
            'n': Cout, 'kh': kh, 'kw': kw}


def _parity3x3(w):
    """Zero-pad the four Unpool+5x5 parity kernels to 3x3 so they all share a
    single 3x3/pad(1,1) conv: (Cout,Cin,5,5) -> (4*Cout,Cin,3,3), parity order
    (a,b) = (0,0),(0,1),(1,0),(1,1)."""
    wp = jnp.pad(w, ((0, 0), (0, 0), (1, 0), (1, 0)))
    ks = [wp[:, :, (1 - a)::2, (1 - b)::2] for a in (0, 1) for b in (0, 1)]
    return jnp.concatenate(ks, axis=0)


def make_bottleneck(pg, inplanes, planes, stride):
    p = {'stride': stride}
    p['c1'] = pack_conv(pg.conv(planes, inplanes, 1, 1), *pg.bn(planes), relu=True)
    p['c2'] = pack_conv(pg.conv(planes, planes, 3, 3), *pg.bn(planes), relu=True)
    p['c3'] = pack_conv(pg.conv(planes * EXPANSION, planes, 1, 1),
                        *pg.bn(planes * EXPANSION), relu=True)
    if stride != 1 or inplanes != planes * EXPANSION:
        p['cd'] = pack_conv(pg.conv(planes * EXPANSION, inplanes, 1, 1),
                            *pg.bn(planes * EXPANSION), relu=False)
    return p


def make_upproj_module(pg, in_c):
    out_c = in_c // 2
    u1w = pg.conv(out_c, in_c, 5, 5)
    u1s, u1b = pg.bn(out_c)
    u2w = pg.conv(out_c, out_c, 3, 3)
    u2s, u2b = pg.bn(out_c)
    bw = pg.conv(out_c, in_c, 5, 5)
    bs, bb = pg.bn(out_c)
    # merge upper-first and bottom unpool-convs (both read the same x):
    # channels ordered (branch[u1,b], parity a, parity b, out_c).
    mw = jnp.concatenate([_parity3x3(u1w), _parity3x3(bw)], axis=0)
    ms = jnp.concatenate([jnp.tile(u1s, 4), jnp.tile(bs, 4)])
    mb = jnp.concatenate([jnp.tile(u1b, 4), jnp.tile(bb, 4)])
    mslope = jnp.concatenate([jnp.zeros((4 * out_c,), jnp.float32),   # ReLU on u1
                              jnp.ones((4 * out_c,), jnp.float32)])   # no ReLU on b
    return {'merged': pack_conv(mw, ms, mb, slope=mslope),
            'u2': pack_conv(u2w, u2s, u2b, relu=True),
            'out_c': out_c}


def make_params(key, layers=50, in_channels=3):
    assert layers == 50, "only the default layers=50 configuration is built"
    pg = ParamGen(key)
    P = {}
    P['conv1'] = pack_conv(pg.conv(64, in_channels, 7, 7), *pg.bn(64), relu=True)
    cfg = [('layer1', 64, 3, 1), ('layer2', 128, 4, 2),
           ('layer3', 256, 6, 2), ('layer4', 512, 3, 2)]
    inplanes = 64
    for name, planes, blocks, stride in cfg:
        blks = []
        for b in range(blocks):
            s = stride if b == 0 else 1
            blks.append(make_bottleneck(pg, inplanes, planes, s))
            inplanes = planes * EXPANSION
        P[name] = blks
    num_channels = 2048
    P['conv2'] = pack_conv(pg.conv(num_channels // 2, num_channels, 1, 1))
    P['bn2_s'], P['bn2_b'] = pg.bn(num_channels // 2)
    c = num_channels // 2
    for i in range(1, 5):
        P['up%d' % i] = make_upproj_module(pg, c)
        c //= 2
    P['conv3'] = pack_conv(pg.conv(1, num_channels // 32, 3, 3))
    return P


# ---------------------------- forward ----------------------------

def bottleneck_forward(x, p):
    identity = x
    y = conv2d_bn(x, p['c1'])
    y = conv2d_bn(y, p['c2'], stride=p['stride'], pad=1)
    if 'cd' in p:
        identity = conv2d_bn(x, p['cd'], stride=p['stride'])
    # conv3 + bn3 + residual add + ReLU fused into one matmul epilogue.
    return conv2d_bn(y, p['c3'], residual=identity)


def upproj_forward(x, p):
    C = p['out_c']
    # one matmul for both branches' Unpool+5x5+BN(+ReLU on the upper half).
    y = conv2d_bn(x, p['merged'], pad=1)               # (N, H, W, 8*C)
    N, H, W, _ = y.shape
    y = y.reshape(N, H, W, 2, 2, 2, C)                 # (n,h,w,branch,a,b,c)
    y = jnp.transpose(y, (3, 0, 1, 4, 2, 5, 6)).reshape(2, N, 2 * H, 2 * W, C)
    u, bres = y[0], y[1]
    # upper 3x3 conv + BN, bottom-branch add + final ReLU fused in epilogue.
    return conv2d_bn(u, p['u2'], pad=1, residual=bres)


def resnet_fcrn_forward(x_nchw, P, output_size=(228, 304)):
    x = jnp.transpose(x_nchw, (0, 2, 3, 1)).astype(jnp.bfloat16)  # NCHW -> NHWC bf16
    # conv1 / bn1 / relu / maxpool
    x = conv2d_bn(x, P['conv1'], stride=2, pad=3)
    x = maxpool_3x3_s2_p1(x)
    # ResNet-50 layer1..layer4
    for name in ('layer1', 'layer2', 'layer3', 'layer4'):
        for blk in P[name]:
            x = bottleneck_forward(x, blk)
    x4 = x
    # conv2 (x_out is pre-bn2, as in the reference) then bn2 as a tiny affine.
    x_out = conv2d_bn(x4, P['conv2'])
    x = (x_out.astype(jnp.float32) * P['bn2_s'] + P['bn2_b']).astype(jnp.bfloat16)
    # UpProj decoder
    x1_ = upproj_forward(x, P['up1'])
    x2_ = upproj_forward(x1_, P['up2'])
    x3_ = upproj_forward(x2_, P['up3'])
    x4_ = upproj_forward(x3_, P['up4'])
    # conv3 + bilinear (align_corners=True)
    x = conv2d_bn(x4_, P['conv3'], pad=1)
    out = bilinear_upsample(x, output_size[0], output_size[1])    # NCHW f32
    to_nchw = lambda t: jnp.transpose(t, (0, 3, 1, 2)).astype(jnp.float32)
    return out, [to_nchw(a) for a in (x_out, x1_, x2_, x3_, x4_)]


if __name__ == "__main__":
    key = jax.random.PRNGKey(0)
    pkey, xkey = jax.random.split(key)
    P = make_params(pkey, layers=50, in_channels=3)
    # small input: batch=2, in_channels=3, 64x64 spatial (must survive /32)
    x = jax.random.normal(xkey, (2, 3, 64, 64), jnp.float32)

    out, aux = resnet_fcrn_forward(x, P, output_size=(228, 304))
    out = jax.block_until_ready(out)
    aux = [jax.block_until_ready(a) for a in aux]

    assert out.shape == (2, 1, 228, 304), out.shape
    assert aux[0].shape == (2, 1024, 2, 2), aux[0].shape     # x_out
    assert aux[1].shape == (2, 512, 4, 4), aux[1].shape      # x1_
    assert aux[2].shape == (2, 256, 8, 8), aux[2].shape      # x2_
    assert aux[3].shape == (2, 128, 16, 16), aux[3].shape    # x3_
    assert aux[4].shape == (2, 64, 32, 32), aux[4].shape     # x4_
    assert bool(jnp.all(jnp.isfinite(out)))
    print("KERNEL_OK")
</pallas_src>

<mosaic_0001>
module attributes {stable_mosaic.version = 11 : i64} {
  func.func @_mm_kernel(%arg0: i32, %arg1: i32, %arg2: i32, %arg3: memref<512x256xbf16, #tpu.memory_space<vmem>>, %arg4: memref<256x128xbf16, #tpu.memory_space<vmem>>, %arg5: memref<1x128xf32, #tpu.memory_space<vmem>>, %arg6: memref<1x128xf32, #tpu.memory_space<vmem>>, %arg7: memref<1x128xf32, #tpu.memory_space<vmem>>, %arg8: memref<512x128xbf16, #tpu.memory_space<vmem>>, %arg9: memref<512x128xf32, #tpu.memory_space<vmem>>) attributes {dimension_semantics = [#tpu.dimension_semantics<parallel>, #tpu.dimension_semantics<parallel>, #tpu.dimension_semantics<arbitrary>], iteration_bounds = array<i64: 4, 1, 1>, scalar_prefetch = 0 : i64, scratch_operands = 1 : i64, tpu.core_type = #tpu.core_type<tc>, window_params = [{transform_indices = @transform_0, window_bounds = array<i64: 512, 256>}, {transform_indices = @transform_1, window_bounds = array<i64: 256, 128>}, {transform_indices = @transform_2, window_bounds = array<i64: 1, 128>}, {transform_indices = @transform_3, window_bounds = array<i64: 1, 128>}, {transform_indices = @transform_4, window_bounds = array<i64: 1, 128>}, {transform_indices = @transform_5, window_bounds = array<i64: 512, 128>}]} {
    %c0_i32 = arith.constant 0 : i32
    %0 = arith.cmpi eq, %arg2, %c0_i32 : i32
    %1 = arith.extui %0 : i1 to i32
    %c0_i32_0 = arith.constant 0 : i32
    %2 = arith.cmpi ne, %1, %c0_i32_0 : i32
    scf.if %2 {
      %cst_10 = arith.constant 0.000000e+00 : f32
      %12 = vector.broadcast %cst_10 : f32 to vector<512x128xf32>
      %c0_11 = arith.constant 0 : index
      %c0_12 = arith.constant 0 : index
      %13 = vector.load %arg9[%c0_11, %c0_12] : memref<512x128xf32, #tpu.memory_space<vmem>>, vector<512x128xf32>
      tpu.vector_store %arg9[%c0_11, %c0_12], %12 {strides = array<i32>} : memref<512x128xf32, #tpu.memory_space<vmem>>, vector<512x128xf32>,
    } else {
    }
    %c0 = arith.constant 0 : index
    %c0_1 = arith.constant 0 : index
    %3 = vector.load %arg9[%c0, %c0_1] : memref<512x128xf32, #tpu.memory_space<vmem>>, vector<512x128xf32>
    %c0_2 = arith.constant 0 : index
    %c0_3 = arith.constant 0 : index
    %4 = vector.load %arg3[%c0_2, %c0_3] : memref<512x256xbf16, #tpu.memory_space<vmem>>, vector<512x256xbf16>
    %c0_4 = arith.constant 0 : index
    %c0_5 = arith.constant 0 : index
    %5 = vector.load %arg4[%c0_4, %c0_5] : memref<256x128xbf16, #tpu.memory_space<vmem>>, vector<256x128xbf16>
    %cst = arith.constant dense<0.000000e+00> : vector<512x128xf32>
    %6 = tpu.matmul %4, %5, %cst {dimension_numbers = #tpu.dot_dimension_numbers<[1], [0], [0], [1], [0, 0, 1, 1], [], []>} : vector<512x256xbf16>, vector<256x128xbf16>, vector<512x128xf32> -> vector<512x128xf32>
    %7 = arith.addf %3, %6 : vector<512x128xf32>
    %c0_6 = arith.constant 0 : index
    %c0_7 = arith.constant 0 : index
    %8 = vector.load %arg9[%c0_6, %c0_7] : memref<512x128xf32, #tpu.memory_space<vmem>>, vector<512x128xf32>
    tpu.vector_store %arg9[%c0_6, %c0_7], %7 {strides = array<i32>} : memref<512x128xf32, #tpu.memory_space<vmem>>, vector<512x128xf32>,
    %c0_i32_8 = arith.constant 0 : i32
    %9 = arith.cmpi eq, %arg2, %c0_i32_8 : i32
    %10 = arith.extui %9 : i1 to i32
    %c0_i32_9 = arith.constant 0 : i32
    %11 = arith.cmpi ne, %10, %c0_i32_9 : i32
    scf.if %11 {
      %c0_10 = arith.constant 0 : index
      %c0_11 = arith.constant 0 : index
      %12 = vector.load %arg9[%c0_10, %c0_11] : memref<512x128xf32, #tpu.memory_space<vmem>>, vector<512x128xf32>
      %c0_12 = arith.constant 0 : index
      %c0_13 = arith.constant 0 : index
      %13 = vector.load %arg5[%c0_12, %c0_13] : memref<1x128xf32, #tpu.memory_space<vmem>>, vector<1x128xf32>
      %14 = vector.broadcast %13 : vector<1x128xf32> to vector<512x128xf32>
      %15 = arith.mulf %12, %14 : vector<512x128xf32>
      %c0_14 = arith.constant 0 : index
      %c0_15 = arith.constant 0 : index
      %16 = vector.load %arg6[%c0_14, %c0_15] : memref<1x128xf32, #tpu.memory_space<vmem>>, vector<1x128xf32>
      %17 = vector.broadcast %16 : vector<1x128xf32> to vector<512x128xf32>
      %18 = arith.addf %15, %17 : vector<512x128xf32>
      %c0_16 = arith.constant 0 : index
      %c0_17 = arith.constant 0 : index
      %19 = vector.load %arg7[%c0_16, %c0_17] : memref<1x128xf32, #tpu.memory_space<vmem>>, vector<1x128xf32>
      %20 = vector.broadcast %19 : vector<1x128xf32> to vector<512x128xf32>
      %21 = arith.mulf %18, %20 : vector<512x128xf32>
      %22 = arith.maximumf %18, %21 : vector<512x128xf32>
      %23 = arith.truncf %22 : vector<512x128xf32> to vector<512x128xbf16>
      %c0_18 = arith.constant 0 : index
      %c0_19 = arith.constant 0 : index
      %24 = vector.load %arg8[%c0_18, %c0_19] : memref<512x128xbf16, #tpu.memory_space<vmem>>, vector<512x128xbf16>
      tpu.vector_store %arg8[%c0_18, %c0_19], %23 {strides = array<i32>} : memref<512x128xbf16, #tpu.memory_space<vmem>>, vector<512x128xbf16>,
    } else {
    }
    return
  }
  func.func @transform_0(%arg0: i32, %arg1: i32, %arg2: i32) -> (i32, i32) {
    %c0_i32 = arith.constant 0 : i32
    return %arg0, %arg2 : i32, i32
  }
  func.func @transform_1(%arg0: i32, %arg1: i32, %arg2: i32) -> (i32, i32) {
    %c0_i32 = arith.constant 0 : i32
    return %arg2, %arg1 : i32, i32
  }
  func.func @transform_2(%arg0: i32, %arg1: i32, %arg2: i32) -> (i32, i32) {
    %c0_i32 = arith.constant 0 : i32
    %c0_i32_0 = arith.constant 0 : i32
    return %c0_i32, %arg1 : i32, i32
  }
  func.func @transform_3(%arg0: i32, %arg1: i32, %arg2: i32) -> (i32, i32) {
    %c0_i32 = arith.constant 0 : i32
    %c0_i32_0 = arith.constant 0 : i32
    return %c0_i32, %arg1 : i32, i32
  }
  func.func @transform_4(%arg0: i32, %arg1: i32, %arg2: i32) -> (i32, i32) {
    %c0_i32 = arith.constant 0 : i32
    %c0_i32_0 = arith.constant 0 : i32
    return %c0_i32, %arg1 : i32, i32
  }
  func.func @transform_5(%arg0: i32, %arg1: i32, %arg2: i32) -> (i32, i32) {
    %c0_i32 = arith.constant 0 : i32
    return %arg0, %arg1 : i32, i32
  }
}

</mosaic_0001>

<llo_original>
// kernel: tpu_custom_call.1
$region0: #{tpu_custom_call.1}
  #allocation0 [shape = 'u32[]', space=smem, size = 0x4, offset = 0x4, fixed_abs, tag = 'smem constant byte address 0x4 - core index']
  #allocation1 [shape = 'u32[144,128]{1,0:T(1,128)}', space=vmem, size = 0x12000, scoped, tag = 'internal scratch']
  #allocation2 [shape = 'f32[512,128]{1,0:T(8,128)}', space=vmem, size = 0x40000, scoped, tag = 'scratch operand']
  %s0 = inlined_call_operand.hbm [shape: bf16[2048,256], index: 0, kind: input, shape index: {}]
  %s1 = inlined_call_operand.hbm [shape: bf16[256,128], index: 1, kind: input, shape index: {}]
  %s2 = inlined_call_operand.vmem [shape: f32[1,128], index: 2, kind: input, shape index: {}]
  %s3 = inlined_call_operand.vmem [shape: f32[1,128], index: 3, kind: input, shape index: {}]
  %s4 = inlined_call_operand.vmem [shape: f32[1,128], index: 4, kind: input, shape index: {}]
  %s5 = inlined_call_operand.hbm [shape: bf16[2048,128], index: 5, kind: output, shape index: {}]
  %s6 = sld [smem:[#allocation0]]
  $region69: #{tpu_custom_call.1} parent=0
    _
  %s8 = ssub.s32 1, %s6
  %s9 = scalar_select 0, %s8, %s6
  $region1: #{tpu_custom_call.1} parent=0
    #allocation3 [shape = 'u8[524288]{0}', space=vmem, size = 0x80000, scoped, tag = 'input window, operand 0']
    #allocation4 [shape = 's32[2]{0}', space=sflag, size = 0x8, scoped, tag = 'scoped memory for tpu_custom_call.1']
    #allocation5 [shape = 's32[2]{0}', space=sflag, size = 0x8, scoped, tag = 'scoped memory for tpu_custom_call.1']
    #allocation6 [shape = 'u8[65536]{0}', space=vmem, size = 0x10000, scoped, tag = 'input window, operand 1, single buffered']
    #allocation7 [shape = 's32[1]{0}', space=sflag, size = 0x4, scoped, tag = 'scoped memory for tpu_custom_call.1']
    #allocation8 [shape = 'u8[262144]{0}', space=vmem, size = 0x40000, scoped, tag = 'output window, operand 0']
    %10 = vsyncpa [#allocation4], 0
    %s11 = scalar_lea.sflag [#allocation4], 1
    %12 = vsyncpa %s11, 0
    %13 = vsyncpa [#allocation7], 0
    %14 = vsyncpa [#allocation5], 0
    %s15 = scalar_lea.sflag [#allocation5], 1
    %16 = vsyncpa %s15, 0
    loop: start=0, step=1, limit=6
    $region2: #{tpu_custom_call.1} parent=1 // loop_pre_header
      _
    $region3: #{tpu_custom_call.1} parent=1 // loop_header
      %s18 = sphi 0, %s22
      %p19 = scmp.ge.s32.totalorder %s18, 6
      %s25 = sphi 0, %s44
      %s26 = sphi 0, %s40
      %s27 = sphi 0, %s36
      %s28 = sphi 0, %s25
      %s29 = sphi 0, %s26
      %s30 = sphi 0, %s27
      %s31 = sphi 0, %s28
      %s32 = sphi 0, %s29
      %s33 = sphi 0, %s30
      %s49 = sphi 0, %s51
      %s52 = sphi 0, %s49
      %s53 = sphi 0, %s52
      %s69 = sphi 0, %s53
      %s77 = sphi 0, %s79
      %s80 = sphi 0, %s77
      %s81 = sphi 0, %s80
      %s97 = sphi 0, %s81
      %s103 = sphi 0, %s105
      %s106 = sphi 0, %s103
      %s107 = sphi 0, %s106
      %s123 = sphi 0, %s107
      %s129 = sphi 0, %s131
      %s132 = sphi 0, %s129
      %s133 = sphi 0, %s132
      %s149 = sphi 0, %s133
      %s155 = sphi 0, %s157
      %s158 = sphi 0, %s155
      %s159 = sphi 0, %s158
      %s175 = sphi 0, %s159
      %s183 = sphi 0, %s185
      %s186 = sphi 0, %s183
      %s187 = sphi 0, %s186
      %s203 = sphi 0, %s187
    $region4: #{tpu_custom_call.1} parent=1 // loop_header_branch
      %21 = sbr.rel (%p19) target = $region8
    $region5: #{tpu_custom_call.1} parent=1 // loop_body
      %s23 = ssub.s32 %s18, 1
      %s24 = ssub.s32 %s18, 2
      %s34 = sadd.s32 1, %s27
      %p35 = scmp.ge.s32.totalorder %s34, 1
      %s36 = scalar_select %p35, 0, %s34
      %s37 = sadd.s32 1, %s26
      %s38 = scalar_select %p35, %s37, %s26
      %p39 = scmp.ge.s32.totalorder %s38, 1
      %s40 = scalar_select %p39, 0, %s38
      %s41 = sadd.s32 1, %s25
      %s42 = scalar_select %p39, %s41, %s25
      %p43 = scmp.ge.s32.totalorder %s42, 4
      %s44 = scalar_select %p43, 0, %s42
      %s45 = ssub.s32 %s25, %s44
      %s46 = ssub.s32 %s27, %s36
      %s47 = sor.u32 %s45, %s46
      %p48 = scmp.eq.s32.totalorder %s47, 0
      %s50 = sadd.s32 %s49, 1
      %s51 = scalar_select %p48, %s49, %s50
      %p54 = pneg %p48
      %p55 = scmp.eq.s32.totalorder %s18, 3
      %p56 = por %p54, %p55
      %p57 = scmp.ne.s32.totalorder %s49, %s52
      %p58 = scmp.eq.s32.totalorder %s18, 0
      %p59 = por %p57, %p58
      %p60 = scmp.ne.s32.totalorder %s49, %s52
      %p61 = scmp.eq.s32.totalorder %s23, 3
      %p62 = por %p60, %p61
      %p63 = scmp.ne.s32.totalorder %s52, %s53
      %p64 = scmp.eq.s32.totalorder %s23, 0
      %p65 = por %p63, %p64
      %p66 = scmp.ne.s32.totalorder %s52, %s53
      %p67 = scmp.eq.s32.totalorder %s24, 3
      %p68 = por %p66, %p67
      %p70 = scmp.ne.s32.totalorder %s53, %s69
      %p71 = scmp.eq.s32.totalorder %s24, 0
      %p72 = por %p70, %p71
      %s73 = ssub.s32 %s27, %s36
      %s74 = ssub.s32 %s26, %s40
      %s75 = sor.u32 %s73, %s74
      %p76 = scmp.eq.s32.totalorder %s75, 0
      %s78 = sadd.s32 %s77, 1
      %s79 = scalar_select %p76, %s77, %s78
      %p82 = pneg %p76
      %p83 = scmp.eq.s32.totalorder %s18, 3
      %p84 = por %p82, %p83
      %p85 = scmp.ne.s32.totalorder %s77, %s80
      %p86 = scmp.eq.s32.totalorder %s18, 0
      %p87 = por %p85, %p86
      %p88 = scmp.ne.s32.totalorder %s77, %s80
      %p89 = scmp.eq.s32.totalorder %s23, 3
      %p90 = por %p88, %p89
      %p91 = scmp.ne.s32.totalorder %s80, %s81
      %p92 = scmp.eq.s32.totalorder %s23, 0
      %p93 = por %p91, %p92
      %p94 = scmp.ne.s32.totalorder %s80, %s81
      %p95 = scmp.eq.s32.totalorder %s24, 3
      %p96 = por %p94, %p95
      %p98 = scmp.ne.s32.totalorder %s81, %s97
      %p99 = scmp.eq.s32.totalorder %s24, 0
      %p100 = por %p98, %p99
      %s101 = ssub.s32 %s26, %s40
      %p102 = scmp.eq.s32.totalorder %s101, 0
      %s104 = sadd.s32 %s103, 1
      %s105 = scalar_select %p102, %s103, %s104
      %p108 = pneg %p102
      %p109 = scmp.eq.s32.totalorder %s18, 3
      %p110 = por %p108, %p109
      %p111 = scmp.ne.s32.totalorder %s103, %s106
      %p112 = scmp.eq.s32.totalorder %s18, 0
      %p113 = por %p111, %p112
      %p114 = scmp.ne.s32.totalorder %s103, %s106
      %p115 = scmp.eq.s32.totalorder %s23, 3
      %p116 = por %p114, %p115
      %p117 = scmp.ne.s32.totalorder %s106, %s107
      %p118 = scmp.eq.s32.totalorder %s23, 0
      %p119 = por %p117, %p118
      %p120 = scmp.ne.s32.totalorder %s106, %s107
      %p121 = scmp.eq.s32.totalorder %s24, 3
      %p122 = por %p120, %p121
      %p124 = scmp.ne.s32.totalorder %s107, %s123
      %p125 = scmp.eq.s32.totalorder %s24, 0
      %p126 = por %p124, %p125
      %s127 = ssub.s32 %s26, %s40
      %p128 = scmp.eq.s32.totalorder %s127, 0
      %s130 = sadd.s32 %s129, 1
      %s131 = scalar_select %p128, %s129, %s130
      %p134 = pneg %p128
      %p135 = scmp.eq.s32.totalorder %s18, 3
      %p136 = por %p134, %p135
      %p137 = scmp.ne.s32.totalorder %s129, %s132
      %p138 = scmp.eq.s32.totalorder %s18, 0
      %p139 = por %p137, %p138
      %p140 = scmp.ne.s32.totalorder %s129, %s132
      %p141 = scmp.eq.s32.totalorder %s23, 3
      %p142 = por %p140, %p141
      %p143 = scmp.ne.s32.totalorder %s132, %s133
      %p144 = scmp.eq.s32.totalorder %s23, 0
      %p145 = por %p143, %p144
      %p146 = scmp.ne.s32.totalorder %s132, %s133
      %p147 = scmp.eq.s32.totalorder %s24, 3
      %p148 = por %p146, %p147
      %p150 = scmp.ne.s32.totalorder %s133, %s149
      %p151 = scmp.eq.s32.totalorder %s24, 0
      %p152 = por %p150, %p151
      %s153 = ssub.s32 %s26, %s40
      %p154 = scmp.eq.s32.totalorder %s153, 0
      %s156 = sadd.s32 %s155, 1
      %s157 = scalar_select %p154, %s155, %s156
      %p160 = pneg %p154
      %p161 = scmp.eq.s32.totalorder %s18, 3
      %p162 = por %p160, %p161
      %p163 = scmp.ne.s32.totalorder %s155, %s158
      %p164 = scmp.eq.s32.totalorder %s18, 0
      %p165 = por %p163, %p164
      %p166 = scmp.ne.s32.totalorder %s155, %s158
      %p167 = scmp.eq.s32.totalorder %s23, 3
      %p168 = por %p166, %p167
      %p169 = scmp.ne.s32.totalorder %s158, %s159
      %p170 = scmp.eq.s32.totalorder %s23, 0
      %p171 = por %p169, %p170
      %p172 = scmp.ne.s32.totalorder %s158, %s159
      %p173 = scmp.eq.s32.totalorder %s24, 3
      %p174 = por %p172, %p173
      %p176 = scmp.ne.s32.totalorder %s159, %s175
      %p177 = scmp.eq.s32.totalorder %s24, 0
      %p178 = por %p176, %p177
      %s179 = ssub.s32 %s25, %s44
      %s180 = ssub.s32 %s26, %s40
      %s181 = sor.u32 %s179, %s180
      %p182 = scmp.eq.s32.totalorder %s181, 0
      %s184 = sadd.s32 %s183, 1
      %s185 = scalar_select %p182, %s183, %s184
      %p188 = pneg %p182
      %p189 = scmp.eq.s32.totalorder %s18, 3
      %p190 = por %p188, %p189
      %p191 = scmp.ne.s32.totalorder %s183, %s186
      %p192 = scmp.eq.s32.totalorder %s18, 0
      %p193 = por %p191, %p192
      %p194 = scmp.ne.s32.totalorder %s183, %s186
      %p195 = scmp.eq.s32.totalorder %s23, 3
      %p196 = por %p194, %p195
      %p197 = scmp.ne.s32.totalorder %s186, %s187
      %p198 = scmp.eq.s32.totalorder %s23, 0
      %p199 = por %p197, %p198
      %p200 = scmp.ne.s32.totalorder %s186, %s187
      %p201 = scmp.eq.s32.totalorder %s24, 3
      %p202 = por %p200, %p201
      %p204 = scmp.ne.s32.totalorder %s187, %s203
      %p205 = scmp.eq.s32.totalorder %s24, 0
      %p206 = por %p204, %p205
      %p207 = scmp.le.s32.totalorder 1, %s18
      %p208 = scmp.lt.s32.totalorder %s18, 5
      %p209 = pnand %p207, %p208
      %p210 = pneg %p209
      // Predicated region
      $region9: #{tpu_custom_call.1} parent=5 // pred_check
        _
      $region10: #{tpu_custom_call.1} parent=5 // pred_check_branch
        %212 = sbr.rel (%p209) target = $region12
      $region11: #{tpu_custom_call.1} parent=5 // pred_region
        %s213 = ssub.s32 %s18, 1
        // Predicated region
        $region13: #{tpu_custom_call.1} parent=11 // pred_check
          %p214 = pneg %p93
        $region14: #{tpu_custom_call.1} parent=11 // pred_check_branch
          %216 = sbr.rel (%p214) target = $region16
        $region15: #{tpu_custom_call.1} parent=11 // pred_region
          %s217 = smul.u32 32, %s30
          %s219 = ssub.s32 2048, 2048
          %220 = vsyncadd [#allocation7], %s219
          %s221 = sadd.s32 %s29, %s217
          %s222 = smul.addr %s221, 64
          %s223 = scalar_lea.hbm %s1, %s222
          %s224 = sshll.u32 [#allocation6], 4
          %s225 = int_to_ptr.vmem [resolvable:$true] %s224
          %230 = dma.hbm_to_vmem [thread:$0]  %s223, 2048, %s225, [#allocation7], 64, 64, 4
        $region16: #{tpu_custom_call.1} parent=11 // pred_fallthru
          _
        // Predicated region
        $region17: #{tpu_custom_call.1} parent=11 // pred_check
          %p231 = pneg %p119
        $region18: #{tpu_custom_call.1} parent=11 // pred_check_branch
          %233 = sbr.rel (%p231) target = $region20
        $region19: #{tpu_custom_call.1} parent=11 // pred_region
          %p234 = scmp.lt.s32.totalorder %s29, 0
          %s235 = scalar_select %p234, %s29, 0
          %s236 = scalar_lea.vmem %s2, %s235
        $region20: #{tpu_custom_call.1} parent=11 // pred_fallthru
          _
        // Predicated region
        $region21: #{tpu_custom_call.1} parent=11 // pred_check
          %p237 = pneg %p145
        $region22: #{tpu_custom_call.1} parent=11 // pred_check_branch
          %239 = sbr.rel (%p237) target = $region24
        $region23: #{tpu_custom_call.1} parent=11 // pred_region
          %p240 = scmp.lt.s32.totalorder %s29, 0
          %s241 = scalar_select %p240, %s29, 0
          %s242 = scalar_lea.vmem %s3, %s241
        $region24: #{tpu_custom_call.1} parent=11 // pred_fallthru
          _
        // Predicated region
        $region25: #{tpu_custom_call.1} parent=11 // pred_check
          %p243 = pneg %p171
        $region26: #{tpu_custom_call.1} parent=11 // pred_check_branch
          %245 = sbr.rel (%p243) target = $region28
        $region27: #{tpu_custom_call.1} parent=11 // pred_region
          %p246 = scmp.lt.s32.totalorder %s29, 0
          %s247 = scalar_select %p246, %s29, 0
          %s248 = scalar_lea.vmem %s4, %s247
        $region28: #{tpu_custom_call.1} parent=11 // pred_fallthru
          _
      $region12: #{tpu_custom_call.1} parent=5 // pred_fallthru
        _
      %p249 = scmp.lt.s32.totalorder %s18, 4
      // Predicated region
      $region29: #{tpu_custom_call.1} parent=5 // pred_check
        %p250 = pneg %p249
      $region30: #{tpu_custom_call.1} parent=5 // pred_check_branch
        %252 = sbr.rel (%p250) target = $region32
      $region31: #{tpu_custom_call.1} parent=5 // pred_region
        // Predicated region
        $region33: #{tpu_custom_call.1} parent=31 // pred_check
          %p253 = pneg %p59
        $region34: #{tpu_custom_call.1} parent=31 // pred_check_branch
          %255 = sbr.rel (%p253) target = $region36
        $region35: #{tpu_custom_call.1} parent=31 // pred_region
          %s256 = sand.u32 %s49, 1
          %s257 = scalar_lea.sflag [#allocation4], %s256
          %s258 = sand.u32 %s49, 1
          %s259 = smul.addr %s258, 512
          %s260 = scalar_lea.vmem [#allocation3], %s259
          %s261 = smul.u32 64, %s25
          %s262 = smul.u32 2, %s27
          %s264 = ssub.s32 8192, 8192
          %265 = vsyncadd %s257, %s264
          %s266 = smul.addr %s261, 2
          %s267 = sadd.s32 %s262, %s266
          %s268 = smul.addr %s267, 64
          %s269 = scalar_lea.hbm %s0, %s268
          %s270 = sshll.u32 %s260, 4
          %s271 = int_to_ptr.vmem [resolvable:$true] %s270
          %276 = dma.hbm_to_vmem [thread:$0]  %s269, 8192, %s271, %s257, 128, 128, 8
        $region36: #{tpu_custom_call.1} parent=31 // pred_fallthru
          _
      $region32: #{tpu_custom_call.1} parent=5 // pred_fallthru
        _
      %p277 = scmp.le.s32.totalorder 1, %s18
      %p278 = scmp.lt.s32.totalorder %s18, 5
      %p279 = pnand %p277, %p278
      %p280 = pneg %p279
      // Predicated region
      $region37: #{tpu_custom_call.1} parent=5 // pred_check
        _
      $region38: #{tpu_custom_call.1} parent=5 // pred_check_branch
        %282 = sbr.rel (%p279) target = $region40
      $region39: #{tpu_custom_call.1} parent=5 // pred_region
        %s283 = ssub.s32 %s18, 1
        %s284 = sand.u32 %s52, 1
        %s285 = scalar_lea.sflag [#allocation4], %s284
        %s286 = sand.u32 %s52, 1
        %s287 = smul.addr %s286, 512
        %s288 = scalar_lea.vmem [#allocation3], %s287
        // Predicated region
        $region41: #{tpu_custom_call.1} parent=39 // pred_check
          %p289 = pneg %p65
        $region42: #{tpu_custom_call.1} parent=39 // pred_check_branch
          %291 = sbr.rel (%p289) target = $region44
        $region43: #{tpu_custom_call.1} parent=39 // pred_region
          %292 = dma.done %s285, 8192
        $region44: #{tpu_custom_call.1} parent=39 // pred_fallthru
          _
        // Predicated region
        $region45: #{tpu_custom_call.1} parent=39 // pred_check
          %p293 = pneg %p93
        $region46: #{tpu_custom_call.1} parent=39 // pred_check_branch
          %295 = sbr.rel (%p293) target = $region48
        $region47: #{tpu_custom_call.1} parent=39 // pred_region
          %296 = dma.done [#allocation7], 2048
        $region48: #{tpu_custom_call.1} parent=39 // pred_fallthru
          _
        %s297 = sand.u32 %s52, 1
        %s298 = scalar_lea.sflag [#allocation4], %s297
        %s299 = sand.u32 %s52, 1
        %s300 = smul.addr %s299, 512
        %s301 = scalar_lea.vmem [#allocation3], %s300
        %p302 = pneg %p65
        %p303 = pneg %p62
        %p304 = pneg %p93
        %p305 = pneg %p90
        %p306 = scmp.lt.s32.totalorder %s29, 0
        %s307 = scalar_select %p306, %s29, 0
        %s308 = scalar_lea.vmem %s2, %s307
        %p309 = pneg %p119
        %p310 = pneg %p116
        %p311 = scmp.lt.s32.totalorder %s29, 0
        %s312 = scalar_select %p311, %s29, 0
        %s313 = scalar_lea.vmem %s3, %s312
        %p314 = pneg %p145
        %p315 = pneg %p142
        %p316 = scmp.lt.s32.totalorder %s29, 0
        %s317 = scalar_select %p316, %s29, 0
        %s318 = scalar_lea.vmem %s4, %s317
        %p319 = pneg %p171
        %p320 = pneg %p168
        %p321 = pneg %p199
        %p322 = pneg %p196
        %s323 = sand.u32 %s186, 1
        %s324 = scalar_lea.sflag [#allocation5], %s323
        %s325 = sand.u32 %s186, 1
        %s326 = smul.addr %s325, 256
        %s327 = scalar_lea.vmem [#allocation8], %s326
        %s328 = smul.u32 64, %s28
        %s329 = smul.u32 2, %s30
        %s330 = smul.u32 32, %s30
        %p331 = scmp.lt.s32.totalorder %s29, 0
        %s332 = scalar_select %p331, %s29, 0
        %s333 = scalar_lea.vmem %s2, %s332
        %p334 = scmp.lt.s32.totalorder %s29, 0
        %s335 = scalar_select %p334, %s29, 0
        %s336 = scalar_lea.vmem %s3, %s335
        %p337 = scmp.lt.s32.totalorder %s29, 0
        %s338 = scalar_select %p337, %s29, 0
        %s339 = scalar_lea.vmem %s4, %s338
        %s340 = smul.u32 64, %s28
        %p342 = scmp.eq.s32.totalorder %s30, 0
        // Predicated region
        $region49: #{tpu_custom_call.1} parent=39 // pred_check
          %p343 = pneg %p342
        $region50: #{tpu_custom_call.1} parent=39 // pred_check_branch
          %345 = sbr.rel (%p343) target = $region52
        $region51: #{tpu_custom_call.1} parent=39 // pred_region
          %346 = vst [vmem:[#allocation2] sm:$0xff] 0.0
          %347 = vst [vmem:[#allocation2 + $0x8] sm:$0xff] 0.0
          %348 = vst [vmem:[#allocation2 + $0x10] sm:$0xff] 0.0
          %349 = vst [vmem:[#allocation2 + $0x18] sm:$0xff] 0.0
          %350 = vst [vmem:[#allocation2 + $0x20] sm:$0xff] 0.0
          %351 = vst [vmem:[#allocation2 + $0x28] sm:$0xff] 0.0
          %352 = vst [vmem:[#allocation2 + $0x30] sm:$0xff] 0.0
          %353 = vst [vmem:[#allocation2 + $0x38] sm:$0xff] 0.0
          %354 = vst [vmem:[#allocation2 + $0x40] sm:$0xff] 0.0
          %355 = vst [vmem:[#allocation2 + $0x48] sm:$0xff] 0.0
          %356 = vst [vmem:[#allocation2 + $0x50] sm:$0xff] 0.0
          %357 = vst [vmem:[#allocation2 + $0x58] sm:$0xff] 0.0
          %358 = vst [vmem:[#allocation2 + $0x60] sm:$0xff] 0.0
          %359 = vst [vmem:[#allocation2 + $0x68] sm:$0xff] 0.0
          %360 = vst [vmem:[#allocation2 + $0x70] sm:$0xff] 0.0
          %361 = vst [vmem:[#allocation2 + $0x78] sm:$0xff] 0.0
          %362 = vst [vmem:[#allocation2 + $0x80] sm:$0xff] 0.0
          %363 = vst [vmem:[#allocation2 + $0x88] sm:$0xff] 0.0
          %364 = vst [vmem:[#allocation2 + $0x90] sm:$0xff] 0.0
          %365 = vst [vmem:[#allocation2 + $0x98] sm:$0xff] 0.0
          %366 = vst [vmem:[#allocation2 + $0xa0] sm:$0xff] 0.0
          %367 = vst [vmem:[#allocation2 + $0xa8] sm:$0xff] 0.0
          %368 = vst [vmem:[#allocation2 + $0xb0] sm:$0xff] 0.0
          %369 = vst [vmem:[#allocation2 + $0xb8] sm:$0xff] 0.0
          %370 = vst [vmem:[#allocation2 + $0xc0] sm:$0xff] 0.0
          %371 = vst [vmem:[#allocation2 + $0xc8] sm:$0xff] 0.0
          %372 = vst [vmem:[#allocation2 + $0xd0] sm:$0xff] 0.0
          %373 = vst [vmem:[#allocation2 + $0xd8] sm:$0xff] 0.0
          %374 = vst [vmem:[#allocation2 + $0xe0] sm:$0xff] 0.0
          %375 = vst [vmem:[#allocation2 + $0xe8] sm:$0xff] 0.0
          %376 = vst [vmem:[#allocation2 + $0xf0] sm:$0xff] 0.0
          %377 = vst [vmem:[#allocation2 + $0xf8] sm:$0xff] 0.0
          %378 = vst [vmem:[#allocation2 + $0x100] sm:$0xff] 0.0
          %379 = vst [vmem:[#allocation2 + $0x108] sm:$0xff] 0.0
          %380 = vst [vmem:[#allocation2 + $0x110] sm:$0xff] 0.0
          %381 = vst [vmem:[#allocation2 + $0x118] sm:$0xff] 0.0
          %382 = vst [vmem:[#allocation2 + $0x120] sm:$0xff] 0.0
          %383 = vst [vmem:[#allocation2 + $0x128] sm:$0xff] 0.0
          %384 = vst [vmem:[#allocation2 + $0x130] sm:$0xff] 0.0
          %385 = vst [vmem:[#allocation2 + $0x138] sm:$0xff] 0.0
          %386 = vst [vmem:[#allocation2 + $0x140] sm:$0xff] 0.0
          %387 = vst [vmem:[#allocation2 + $0x148] sm:$0xff] 0.0
          %388 = vst [vmem:[#allocation2 + $0x150] sm:$0xff] 0.0
          %389 = vst [vmem:[#allocation2 + $0x158] sm:$0xff] 0.0
          %390 = vst [vmem:[#allocation2 + $0x160] sm:$0xff] 0.0
          %391 = vst [vmem:[#allocation2 + $0x168] sm:$0xff] 0.0
          %392 = vst [vmem:[#allocation2 + $0x170] sm:$0xff] 0.0
          %393 = vst [vmem:[#allocation2 + $0x178] sm:$0xff] 0.0
          %394 = vst [vmem:[#allocation2 + $0x180] sm:$0xff] 0.0
          %395 = vst [vmem:[#allocation2 + $0x188] sm:$0xff] 0.0
          %396 = vst [vmem:[#allocation2 + $0x190] sm:$0xff] 0.0
          %397 = vst [vmem:[#allocation2 + $0x198] sm:$0xff] 0.0
          %398 = vst [vmem:[#allocation2 + $0x1a0] sm:$0xff] 0.0
          %399 = vst [vmem:[#allocation2 + $0x1a8] sm:$0xff] 0.0
          %400 = vst [vmem:[#allocation2 + $0x1b0] sm:$0xff] 0.0
          %401 = vst [vmem:[#allocation2 + $0x1b8] sm:$0xff] 0.0
          %402 = vst [vmem:[#allocation2 + $0x1c0] sm:$0xff] 0.0
          %403 = vst [vmem:[#allocation2 + $0x1c8] sm:$0xff] 0.0
          %404 = vst [vmem:[#allocation2 + $0x1d0] sm:$0xff] 0.0
          %405 = vst [vmem:[#allocation2 + $0x1d8] sm:$0xff] 0.0
          %406 = vst [vmem:[#allocation2 + $0x1e0] sm:$0xff] 0.0
          %407 = vst [vmem:[#allocation2 + $0x1e8] sm:$0xff] 0.0
          %408 = vst [vmem:[#allocation2 + $0x1f0] sm:$0xff] 0.0
          %409 = vst [vmem:[#allocation2 + $0x1f8] sm:$0xff] 0.0
        $region52: #{tpu_custom_call.1} parent=39 // pred_fallthru
          _
        %v410 = vld [vmem:[#allocation2] sm:$0xff]
        %v411 = vld [vmem:[#allocation2 + $0x8] sm:$0xff]
        %v412 = vld [vmem:[#allocation2 + $0x10] sm:$0xff]
        %v413 = vld [vmem:[#allocation2 + $0x18] sm:$0xff]
        %v414 = vld [vmem:[#allocation2 + $0x20] sm:$0xff]
        %v415 = vld [vmem:[#allocation2 + $0x28] sm:$0xff]
        %v416 = vld [vmem:[#allocation2 + $0x30] sm:$0xff]
        %v417 = vld [vmem:[#allocation2 + $0x38] sm:$0xff]
        %v418 = vld [vmem:[#allocation2 + $0x40] sm:$0xff]
        %v419 = vld [vmem:[#allocation2 + $0x48] sm:$0xff]
        %v420 = vld [vmem:[#allocation2 + $0x50] sm:$0xff]
        %v421 = vld [vmem:[#allocation2 + $0x58] sm:$0xff]
        %v422 = vld [vmem:[#allocation2 + $0x60] sm:$0xff]
        %v423 = vld [vmem:[#allocation2 + $0x68] sm:$0xff]
        %v424 = vld [vmem:[#allocation2 + $0x70] sm:$0xff]
        %v425 = vld [vmem:[#allocation2 + $0x78] sm:$0xff]
        %v426 = vld [vmem:[#allocation2 + $0x80] sm:$0xff]
        %v427 = vld [vmem:[#allocation2 + $0x88] sm:$0xff]
        %v428 = vld [vmem:[#allocation2 + $0x90] sm:$0xff]
        %v429 = vld [vmem:[#allocation2 + $0x98] sm:$0xff]
        %v430 = vld [vmem:[#allocation2 + $0xa0] sm:$0xff]
        %v431 = vld [vmem:[#allocation2 + $0xa8] sm:$0xff]
        %v432 = vld [vmem:[#allocation2 + $0xb0] sm:$0xff]
        %v433 = vld [vmem:[#allocation2 + $0xb8] sm:$0xff]
        %v434 = vld [vmem:[#allocation2 + $0xc0] sm:$0xff]
        %v435 = vld [vmem:[#allocation2 + $0xc8] sm:$0xff]
        %v436 = vld [vmem:[#allocation2 + $0xd0] sm:$0xff]
        %v437 = vld [vmem:[#allocation2 + $0xd8] sm:$0xff]
        %v438 = vld [vmem:[#allocation2 + $0xe0] sm:$0xff]
        %v439 = vld [vmem:[#allocation2 + $0xe8] sm:$0xff]
        %v440 = vld [vmem:[#allocation2 + $0xf0] sm:$0xff]
        %v441 = vld [vmem:[#allocation2 + $0xf8] sm:$0xff]
        %v442 = vld [vmem:[#allocation2 + $0x100] sm:$0xff]
        %v443 = vld [vmem:[#allocation2 + $0x108] sm:$0xff]
        %v444 = vld [vmem:[#allocation2 + $0x110] sm:$0xff]
        %v445 = vld [vmem:[#allocation2 + $0x118] sm:$0xff]
        %v446 = vld [vmem:[#allocation2 + $0x120] sm:$0xff]
        %v447 = vld [vmem:[#allocation2 + $0x128] sm:$0xff]
        %v448 = vld [vmem:[#allocation2 + $0x130] sm:$0xff]
        %v449 = vld [vmem:[#allocation2 + $0x138] sm:$0xff]
        %v450 = vld [vmem:[#allocation2 + $0x140] sm:$0xff]
        %v451 = vld [vmem:[#allocation2 + $0x148] sm:$0xff]
        %v452 = vld [vmem:[#allocation2 + $0x150] sm:$0xff]
        %v453 = vld [vmem:[#allocation2 + $0x158] sm:$0xff]
        %v454 = vld [vmem:[#allocation2 + $0x160] sm:$0xff]
        %v455 = vld [vmem:[#allocation2 + $0x168] sm:$0xff]
        %v456 = vld [vmem:[#allocation2 + $0x170] sm:$0xff]
        %v457 = vld [vmem:[#allocation2 + $0x178] sm:$0xff]
        %v458 = vld [vmem:[#allocation2 + $0x180] sm:$0xff]
        %v459 = vld [vmem:[#allocation2 + $0x188] sm:$0xff]
        %v460 = vld [vmem:[#allocation2 + $0x190] sm:$0xff]
        %v461 = vld [vmem:[#allocation2 + $0x198] sm:$0xff]
        %v462 = vld [vmem:[#allocation2 + $0x1a0] sm:$0xff]
        %v463 = vld [vmem:[#allocation2 + $0x1a8] sm:$0xff]
        %v464 = vld [vmem:[#allocation2 + $0x1b0] sm:$0xff]
        %v465 = vld [vmem:[#allocation2 + $0x1b8] sm:$0xff]
        %v466 = vld [vmem:[#allocation2 + $0x1c0] sm:$0xff]
        %v467 = vld [vmem:[#allocation2 + $0x1c8] sm:$0xff]
        %v468 = vld [vmem:[#allocation2 + $0x1d0] sm:$0xff]
        %v469 = vld [vmem:[#allocation2 + $0x1d8] sm:$0xff]
        %v470 = vld [vmem:[#allocation2 + $0x1e0] sm:$0xff]
        %v471 = vld [vmem:[#allocation2 + $0x1e8] sm:$0xff]
        %v472 = vld [vmem:[#allocation2 + $0x1f0] sm:$0xff]
        %v473 = vld [vmem:[#allocation2 + $0x1f8] sm:$0xff]
        %v474 = vld [vmem:[%s288] sm:$0xff]
        %v475 = vld [vmem:[%s288 + $0x8] sm:$0xff]
        %v476 = vld [vmem:[%s288 + $0x10] sm:$0xff]
        %v477 = vld [vmem:[%s288 + $0x18] sm:$0xff]
        %v478 = vld [vmem:[%s288 + $0x20] sm:$0xff]
        %v479 = vld [vmem:[%s288 + $0x28] sm:$0xff]
        %v480 = vld [vmem:[%s288 + $0x30] sm:$0xff]
        %v481 = vld [vmem:[%s288 + $0x38] sm:$0xff]
        %v482 = vld [vmem:[%s288 + $0x40] sm:$0xff]
        %v483 = vld [vmem:[%s288 + $0x48] sm:$0xff]
        %v484 = vld [vmem:[%s288 + $0x50] sm:$0xff]
        %v485 = vld [vmem:[%s288 + $0x58] sm:$0xff]
        %v486 = vld [vmem:[%s288 + $0x60] sm:$0xff]
        %v487 = vld [vmem:[%s288 + $0x68] sm:$0xff]
        %v488 = vld [vmem:[%s288 + $0x70] sm:$0xff]
        %v489 = vld [vmem:[%s288 + $0x78] sm:$0xff]
        %v490 = vld [vmem:[%s288 + $0x80] sm:$0xff]
        %v491 = vld [vmem:[%s288 + $0x88] sm:$0xff]
        %v492 = vld [vmem:[%s288 + $0x90] sm:$0xff]
        %v493 = vld [vmem:[%s288 + $0x98] sm:$0xff]
        %v494 = vld [vmem:[%s288 + $0xa0] sm:$0xff]
        %v495 = vld [vmem:[%s288 + $0xa8] sm:$0xff]
        %v496 = vld [vmem:[%s288 + $0xb0] sm:$0xff]
        %v497 = vld [vmem:[%s288 + $0xb8] sm:$0xff]
        %v498 = vld [vmem:[%s288 + $0xc0] sm:$0xff]
        %v499 = vld [vmem:[%s288 + $0xc8] sm:$0xff]
        %v500 = vld [vmem:[%s288 + $0xd0] sm:$0xff]
        %v501 = vld [vmem:[%s288 + $0xd8] sm:$0xff]
        %v502 = vld [vmem:[%s288 + $0xe0] sm:$0xff]
        %v503 = vld [vmem:[%s288 + $0xe8] sm:$0xff]
        %v504 = vld [vmem:[%s288 + $0xf0] sm:$0xff]
        %v505 = vld [vmem:[%s288 + $0xf8] sm:$0xff]
        %v506 = vld [vmem:[%s288 + $0x100] sm:$0xff]
        %v507 = vld [vmem:[%s288 + $0x108] sm:$0xff]
        %v508 = vld [vmem:[%s288 + $0x110] sm:$0xff]
        %v509 = vld [vmem:[%s288 + $0x118] sm:$0xff]
        %v510 = vld [vmem:[%s288 + $0x120] sm:$0xff]
        %v511 = vld [vmem:[%s288 + $0x128] sm:$0xff]
        %v512 = vld [vmem:[%s288 + $0x130] sm:$0xff]
        %v513 = vld [vmem:[%s288 + $0x138] sm:$0xff]
        %v514 = vld [vmem:[%s288 + $0x140] sm:$0xff]
        %v515 = vld [vmem:[%s288 + $0x148] sm:$0xff]
        %v516 = vld [vmem:[%s288 + $0x150] sm:$0xff]
        %v517 = vld [vmem:[%s288 + $0x158] sm:$0xff]
        %v518 = vld [vmem:[%s288 + $0x160] sm:$0xff]
        %v519 = vld [vmem:[%s288 + $0x168] sm:$0xff]
        %v520 = vld [vmem:[%s288 + $0x170] sm:$0xff]
        %v521 = vld [vmem:[%s288 + $0x178] sm:$0xff]
        %v522 = vld [vmem:[%s288 + $0x180] sm:$0xff]
        %v523 = vld [vmem:[%s288 + $0x188] sm:$0xff]
        %v524 = vld [vmem:[%s288 + $0x190] sm:$0xff]
        %v525 = vld [vmem:[%s288 + $0x198] sm:$0xff]
        %v526 = vld [vmem:[%s288 + $0x1a0] sm:$0xff]
        %v527 = vld [vmem:[%s288 + $0x1a8] sm:$0xff]
        %v528 = vld [vmem:[%s288 + $0x1b0] sm:$0xff]
        %v529 = vld [vmem:[%s288 + $0x1b8] sm:$0xff]
        %v530 = vld [vmem:[%s288 + $0x1c0] sm:$0xff]
        %v531 = vld [vmem:[%s288 + $0x1c8] sm:$0xff]
        %v532 = vld [vmem:[%s288 + $0x1d0] sm:$0xff]
        %v533 = vld [vmem:[%s288 + $0x1d8] sm:$0xff]
        %v534 = vld [vmem:[%s288 + $0x1e0] sm:$0xff]
        %v535 = vld [vmem:[%s288 + $0x1e8] sm:$0xff]
        %v536 = vld [vmem:[%s288 + $0x1f0] sm:$0xff]
        %v537 = vld [vmem:[%s288 + $0x1f8] sm:$0xff]
        %v538 = vld [vmem:[#allocation6] sm:$0xf]
        %v539 = vld [vmem:[#allocation6 + $0x4] sm:$0xf]
        %v540 = vld [vmem:[#allocation6 + $0x8] sm:$0xf]
        %v541 = vld [vmem:[#allocation6 + $0xc] sm:$0xf]
        %v542 = vld [vmem:[#allocation6 + $0x10] sm:$0xf]
        %v543 = vld [vmem:[#allocation6 + $0x14] sm:$0xf]
        %v544 = vld [vmem:[#allocation6 + $0x18] sm:$0xf]
        %v545 = vld [vmem:[#allocation6 + $0x1c] sm:$0xf]
        %v546 = vld [vmem:[#allocation6 + $0x20] sm:$0xf]
        %v547 = vld [vmem:[#allocation6 + $0x24] sm:$0xf]
        %v548 = vld [vmem:[#allocation6 + $0x28] sm:$0xf]
        %v549 = vld [vmem:[#allocation6 + $0x2c] sm:$0xf]
        %v550 = vld [vmem:[#allocation6 + $0x30] sm:$0xf]
        %v551 = vld [vmem:[#allocation6 + $0x34] sm:$0xf]
        %v552 = vld [vmem:[#allocation6 + $0x38] sm:$0xf]
        %v553 = vld [vmem:[#allocation6 + $0x3c] sm:$0xf]
        %v554 = vld [vmem:[#allocation6 + $0x40] sm:$0xf]
        %v555 = vld [vmem:[#allocation6 + $0x44] sm:$0xf]
        %v556 = vld [vmem:[#allocation6 + $0x48] sm:$0xf]
        %v557 = vld [vmem:[#allocation6 + $0x4c] sm:$0xf]
        %v558 = vld [vmem:[#allocation6 + $0x50] sm:$0xf]
        %v559 = vld [vmem:[#allocation6 + $0x54] sm:$0xf]
        %v560 = vld [vmem:[#allocation6 + $0x58] sm:$0xf]
        %v561 = vld [vmem:[#allocation6 + $0x5c] sm:$0xf]
        %v562 = vld [vmem:[#allocation6 + $0x60] sm:$0xf]
        %v563 = vld [vmem:[#allocation6 + $0x64] sm:$0xf]
        %v564 = vld [vmem:[#allocation6 + $0x68] sm:$0xf]
        %v565 = vld [vmem:[#allocation6 + $0x6c] sm:$0xf]
        %v566 = vld [vmem:[#allocation6 + $0x70] sm:$0xf]
        %v567 = vld [vmem:[#allocation6 + $0x74] sm:$0xf]
        %v568 = vld [vmem:[#allocation6 + $0x78] sm:$0xf]
        %v569 = vld [vmem:[#allocation6 + $0x7c] sm:$0xf]
        %v634 = vunpack.c.l.b16 %v474
        %v635 = vunpack.c.h.b16 %v474
        %v636 = vunpack.c.l.b16 %v475
        %v637 = vunpack.c.h.b16 %v475
        %v638 = vunpack.c.l.b16 %v476
        %v639 = vunpack.c.h.b16 %v476
        %v640 = vunpack.c.l.b16 %v477
        %v641 = vunpack.c.h.b16 %v477
        %v642 = vunpack.c.l.b16 %v478
        %v643 = vunpack.c.h.b16 %v478
        %v644 = vunpack.c.l.b16 %v479
        %v645 = vunpack.c.h.b16 %v479
        %v646 = vunpack.c.l.b16 %v480
        %v647 = vunpack.c.h.b16 %v480
        %v648 = vunpack.c.l.b16 %v481
        %v649 = vunpack.c.h.b16 %v481
        %v650 = vunpack.c.l.b16 %v482
        %v651 = vunpack.c.h.b16 %v482
        %v652 = vunpack.c.l.b16 %v483
        %v653 = vunpack.c.h.b16 %v483
        %v654 = vunpack.c.l.b16 %v484
        %v655 = vunpack.c.h.b16 %v484
        %v656 = vunpack.c.l.b16 %v485
        %v657 = vunpack.c.h.b16 %v485
        %v658 = vunpack.c.l.b16 %v486
        %v659 = vunpack.c.h.b16 %v486
        %v660 = vunpack.c.l.b16 %v487
        %v661 = vunpack.c.h.b16 %v487
        %v662 = vunpack.c.l.b16 %v488
        %v663 = vunpack.c.h.b16 %v488
        %v664 = vunpack.c.l.b16 %v489
        %v665 = vunpack.c.h.b16 %v489
        %v666 = vunpack.c.l.b16 %v490
        %v667 = vunpack.c.h.b16 %v490
        %v668 = vunpack.c.l.b16 %v491
        %v669 = vunpack.c.h.b16 %v491
        %v670 = vunpack.c.l.b16 %v492
        %v671 = vunpack.c.h.b16 %v492
        %v672 = vunpack.c.l.b16 %v493
        %v673 = vunpack.c.h.b16 %v493
        %v674 = vunpack.c.l.b16 %v494
        %v675 = vunpack.c.h.b16 %v494
        %v676 = vunpack.c.l.b16 %v495
        %v677 = vunpack.c.h.b16 %v495
        %v678 = vunpack.c.l.b16 %v496
        %v679 = vunpack.c.h.b16 %v496
        %v680 = vunpack.c.l.b16 %v497
        %v681 = vunpack.c.h.b16 %v497
        %v682 = vunpack.c.l.b16 %v498
        %v683 = vunpack.c.h.b16 %v498
        %v684 = vunpack.c.l.b16 %v499
        %v685 = vunpack.c.h.b16 %v499
        %v686 = vunpack.c.l.b16 %v500
        %v687 = vunpack.c.h.b16 %v500
        %v688 = vunpack.c.l.b16 %v501
        %v689 = vunpack.c.h.b16 %v501
        %v690 = vunpack.c.l.b16 %v502
        %v691 = vunpack.c.h.b16 %v502
        %v692 = vunpack.c.l.b16 %v503
        %v693 = vunpack.c.h.b16 %v503
        %v694 = vunpack.c.l.b16 %v504
        %v695 = vunpack.c.h.b16 %v504
        %v696 = vunpack.c.l.b16 %v505
        %v697 = vunpack.c.h.b16 %v505
        %v698 = vunpack.c.l.b16 %v506
        %v699 = vunpack.c.h.b16 %v506
        %v700 = vunpack.c.l.b16 %v507
        %v701 = vunpack.c.h.b16 %v507
        %v702 = vunpack.c.l.b16 %v508
        %v703 = vunpack.c.h.b16 %v508
        %v704 = vunpack.c.l.b16 %v509
        %v705 = vunpack.c.h.b16 %v509
        %v706 = vunpack.c.l.b16 %v510
        %v707 = vunpack.c.h.b16 %v510
        %v708 = vunpack.c.l.b16 %v511
        %v709 = vunpack.c.h.b16 %v511
        %v710 = vunpack.c.l.b16 %v512
        %v711 = vunpack.c.h.b16 %v512
        %v712 = vunpack.c.l.b16 %v513
        %v713 = vunpack.c.h.b16 %v513
        %v714 = vunpack.c.l.b16 %v514
        %v715 = vunpack.c.h.b16 %v514
        %v716 = vunpack.c.l.b16 %v515
        %v717 = vunpack.c.h.b16 %v515
        %v718 = vunpack.c.l.b16 %v516
        %v719 = vunpack.c.h.b16 %v516
        %v720 = vunpack.c.l.b16 %v517
        %v721 = vunpack.c.h.b16 %v517
        %v722 = vunpack.c.l.b16 %v518
        %v723 = vunpack.c.h.b16 %v518
        %v724 = vunpack.c.l.b16 %v519
        %v725 = vunpack.c.h.b16 %v519
        %v726 = vunpack.c.l.b16 %v520
        %v727 = vunpack.c.h.b16 %v520
        %v728 = vunpack.c.l.b16 %v521
        %v729 = vunpack.c.h.b16 %v521
        %v730 = vunpack.c.l.b16 %v522
        %v731 = vunpack.c.h.b16 %v522
        %v732 = vunpack.c.l.b16 %v523
        %v733 = vunpack.c.h.b16 %v523
        %v734 = vunpack.c.l.b16 %v524
        %v735 = vunpack.c.h.b16 %v524
        %v736 = vunpack.c.l.b16 %v525
        %v737 = vunpack.c.h.b16 %v525
        %v738 = vunpack.c.l.b16 %v526
        %v739 = vunpack.c.h.b16 %v526
        %v740 = vunpack.c.l.b16 %v527
        %v741 = vunpack.c.h.b16 %v527
        %v742 = vunpack.c.l.b16 %v528
        %v743 = vunpack.c.h.b16 %v528
        %v744 = vunpack.c.l.b16 %v529
        %v745 = vunpack.c.h.b16 %v529
        %v746 = vunpack.c.l.b16 %v530
        %v747 = vunpack.c.h.b16 %v530
        %v748 = vunpack.c.l.b16 %v531
        %v749 = vunpack.c.h.b16 %v531
        %v750 = vunpack.c.l.b16 %v532
        %v751 = vunpack.c.h.b16 %v532
        %v752 = vunpack.c.l.b16 %v533
        %v753 = vunpack.c.h.b16 %v533
        %v754 = vunpack.c.l.b16 %v534
        %v755 = vunpack.c.h.b16 %v534
        %v756 = vunpack.c.l.b16 %v535
        %v757 = vunpack.c.h.b16 %v535
        %v758 = vunpack.c.l.b16 %v536
        %v759 = vunpack.c.h.b16 %v536
        %v760 = vunpack.c.l.b16 %v537
        %v761 = vunpack.c.h.b16 %v537
        %v762 = vpack.c.b16 %v636, %v634
        %v763 = vpack.c.b16 %v637, %v635
        %v764 = vpack.c.b16 %v640, %v638
        %v765 = vpack.c.b16 %v641, %v639
        %v766 = vpack.c.b16 %v644, %v642
        %v767 = vpack.c.b16 %v645, %v643
        %v768 = vpack.c.b16 %v648, %v646
        %v769 = vpack.c.b16 %v649, %v647
        %v770 = vpack.c.b16 %v652, %v650
        %v771 = vpack.c.b16 %v653, %v651
        %v772 = vpack.c.b16 %v656, %v654
        %v773 = vpack.c.b16 %v657, %v655
        %v774 = vpack.c.b16 %v660, %v658
        %v775 = vpack.c.b16 %v661, %v659
        %v776 = vpack.c.b16 %v664, %v662
        %v777 = vpack.c.b16 %v665, %v663
        %v778 = vpack.c.b16 %v668, %v666
        %v779 = vpack.c.b16 %v669, %v667
        %v780 = vpack.c.b16 %v672, %v670
        %v781 = vpack.c.b16 %v673, %v671
        %v782 = vpack.c.b16 %v676, %v674
        %v783 = vpack.c.b16 %v677, %v675
        %v784 = vpack.c.b16 %v680, %v678
        %v785 = vpack.c.b16 %v681, %v679
        %v786 = vpack.c.b16 %v684, %v682
        %v787 = vpack.c.b16 %v685, %v683
        %v788 = vpack.c.b16 %v688, %v686
        %v789 = vpack.c.b16 %v689, %v687
        %v790 = vpack.c.b16 %v692, %v690
        %v791 = vpack.c.b16 %v693, %v691
        %v792 = vpack.c.b16 %v696, %v694
        %v793 = vpack.c.b16 %v697, %v695
        %v794 = vpack.c.b16 %v700, %v698
        %v795 = vpack.c.b16 %v701, %v699
        %v796 = vpack.c.b16 %v704, %v702
        %v797 = vpack.c.b16 %v705, %v703
        %v798 = vpack.c.b16 %v708, %v706
        %v799 = vpack.c.b16 %v709, %v707
        %v800 = vpack.c.b16 %v712, %v710
        %v801 = vpack.c.b16 %v713, %v711
        %v802 = vpack.c.b16 %v716, %v714
        %v803 = vpack.c.b16 %v717, %v715
        %v804 = vpack.c.b16 %v720, %v718
        %v805 = vpack.c.b16 %v721, %v719
        %v806 = vpack.c.b16 %v724, %v722
        %v807 = vpack.c.b16 %v725, %v723
        %v808 = vpack.c.b16 %v728, %v726
        %v809 = vpack.c.b16 %v729, %v727
        %v810 = vpack.c.b16 %v732, %v730
        %v811 = vpack.c.b16 %v733, %v731
        %v812 = vpack.c.b16 %v736, %v734
        %v813 = vpack.c.b16 %v737, %v735
        %v814 = vpack.c.b16 %v740, %v738
        %v815 = vpack.c.b16 %v741, %v739
        %v816 = vpack.c.b16 %v744, %v742
        %v817 = vpack.c.b16 %v745, %v743
        %v818 = vpack.c.b16 %v748, %v746
        %v819 = vpack.c.b16 %v749, %v747
        %v820 = vpack.c.b16 %v752, %v750
        %v821 = vpack.c.b16 %v753, %v751
        %v822 = vpack.c.b16 %v756, %v754
        %v823 = vpack.c.b16 %v757, %v755
        %v824 = vpack.c.b16 %v760, %v758
        %v825 = vpack.c.b16 %v761, %v759
        %v922 = vunpack.c.l.b16 %v538
        %v923 = vunpack.c.l.b16 %v539
        %v924 = vunpack.c.l.b16 %v540
        %v925 = vunpack.c.l.b16 %v541
        %v926 = vunpack.c.l.b16 %v542
        %v927 = vunpack.c.l.b16 %v543
        %v928 = vunpack.c.l.b16 %v544
        %v929 = vunpack.c.l.b16 %v545
        %v930 = vunpack.c.l.b16 %v546
        %v931 = vunpack.c.l.b16 %v547
        %v932 = vunpack.c.l.b16 %v548
        %v933 = vunpack.c.l.b16 %v549
        %v934 = vunpack.c.l.b16 %v550
        %v935 = vunpack.c.l.b16 %v551
        %v936 = vunpack.c.l.b16 %v552
        %v937 = vunpack.c.l.b16 %v553
        %v938 = vunpack.c.l.b16 %v554
        %v939 = vunpack.c.l.b16 %v555
        %v940 = vunpack.c.l.b16 %v556
        %v941 = vunpack.c.l.b16 %v557
        %v942 = vunpack.c.l.b16 %v558
        %v943 = vunpack.c.l.b16 %v559
        %v944 = vunpack.c.l.b16 %v560
        %v945 = vunpack.c.l.b16 %v561
        %v946 = vunpack.c.l.b16 %v562
        %v947 = vunpack.c.l.b16 %v563
        %v948 = vunpack.c.l.b16 %v564
        %v949 = vunpack.c.l.b16 %v565
        %v950 = vunpack.c.l.b16 %v566
        %v951 = vunpack.c.l.b16 %v567
        %v952 = vunpack.c.l.b16 %v568
        %v953 = vunpack.c.l.b16 %v569
        %v954 = vpack.c.b16 %v923, %v922
        %v955 = vpack.c.b16 %v925, %v924
        %v956 = vpack.c.b16 %v927, %v926
        %v957 = vpack.c.b16 %v929, %v928
        %v958 = vpack.c.b16 %v931, %v930
        %v959 = vpack.c.b16 %v933, %v932
        %v960 = vpack.c.b16 %v935, %v934
        %v961 = vpack.c.b16 %v937, %v936
        %v962 = vpack.c.b16 %v939, %v938
        %v963 = vpack.c.b16 %v941, %v940
        %v964 = vpack.c.b16 %v943, %v942
        %v965 = vpack.c.b16 %v945, %v944
        %v966 = vpack.c.b16 %v947, %v946
        %v967 = vpack.c.b16 %v949, %v948
        %v968 = vpack.c.b16 %v951, %v950
        %v969 = vpack.c.b16 %v953, %v952
        %986 = vmatprep.subr.bf16.mxu0 0
        %987 = vmatpush1.bf16.msra.mxu0 %v954
        %988 = vmatprep.subr.bf16.mxu0 0
        %989 = vmatpush1.bf16.msra.mxu0 %v955
        %990 = vmatprep.subr.bf16.mxu0 0
        %991 = vmatpush1.bf16.msra.mxu0 %v956
        %992 = vmatprep.subr.bf16.mxu0 0
        %993 = vmatpush1.bf16.msra.mxu0 %v957
        %994 = vmatprep.subr.bf16.mxu0 0
        %995 = vmatpush1.bf16.msra.mxu0 %v958
        %996 = vmatprep.subr.bf16.mxu0 0
        %997 = vmatpush1.bf16.msra.mxu0 %v959
        %998 = vmatprep.subr.bf16.mxu0 0
        %999 = vmatpush1.bf16.msra.mxu0 %v960
        %1000 = vmatprep.subr.bf16.mxu0 0
        %1001 = vmatpush1.bf16.msra.mxu0 %v961
        %1002 = vmatprep.subr.bf16.mxu0 0
        %1003 = vmatpush1.bf16.msra.mxu0 %v962
        %1004 = vmatprep.subr.bf16.mxu0 0
        %1005 = vmatpush1.bf16.msra.mxu0 %v963
        %1006 = vmatprep.subr.bf16.mxu0 0
        %1007 = vmatpush1.bf16.msra.mxu0 %v964
        %1008 = vmatprep.subr.bf16.mxu0 0
        %1009 = vmatpush1.bf16.msra.mxu0 %v965
        %1010 = vmatprep.subr.bf16.mxu0 0
        %1011 = vmatpush1.bf16.msra.mxu0 %v966
        %1012 = vmatprep.subr.bf16.mxu0 0
        %1013 = vmatpush1.bf16.msra.mxu0 %v967
        %1014 = vmatprep.subr.bf16.mxu0 0
        %1015 = vmatpush1.bf16.msra.mxu0 %v968
        %1016 = vmatprep.subr.bf16.mxu0 0
        %1017 = vmatpush1.bf16.msra.mxu0 %v969
        %1018 = vmatprep.mubr.bf16.mxu0 %v763
        %1019 = vmatmul.mubr.bf16.gmra.mrb[0].mxu0 %v762
        %v1020 = vpop.f32.mrb[0].mxu0
        %v1021 = vadd.f32 0.0, %v1020
        %v1022 = vpop.f32.mrb[0].mxu0
        %v1023 = vpop.f32.mrb[0].mxu0
        %v1024 = vadd.f32 0.0, %v1023
        %v1025 = vpop.f32.mrb[0].mxu0
        %1026 = vmatprep.mubr.bf16.mxu0 %v765
        %1027 = vmatmul.mubr.bf16.gmra.mrb[0].mxu0 %v764
        %v1028 = vpop.f32.mrb[0].mxu0
        %v1029 = vadd.f32 0.0, %v1028
        %v1030 = vpop.f32.mrb[0].mxu0
        %v1031 = vpop.f32.mrb[0].mxu0
        %v1032 = vadd.f32 0.0, %v1031
        %v1033 = vpop.f32.mrb[0].mxu0
        %1034 = vmatprep.mubr.bf16.mxu0 %v767
        %1035 = vmatmul.mubr.bf16.gmra.mrb[0].mxu0 %v766
        %v1036 = vpop.f32.mrb[0].mxu0
        %v1037 = vadd.f32 0.0, %v1036
        %v1038 = vpop.f32.mrb[0].mxu0
        %v1039 = vpop.f32.mrb[0].mxu0
        %v1040 = vadd.f32 0.0, %v1039
        %v1041 = vpop.f32.mrb[0].mxu0
        %1042 = vmatprep.mubr.bf16.mxu0 %v769
        %1043 = vmatmul.mubr.bf16.gmra.mrb[0].mxu0 %v768
        %v1044 = vpop.f32.mrb[0].mxu0
        %v1045 = vadd.f32 0.0, %v1044
        %v1046 = vpop.f32.mrb[0].mxu0
        %v1047 = vpop.f32.mrb[0].mxu0
        %v1048 = vadd.f32 0.0, %v1047
        %v1049 = vpop.f32.mrb[0].mxu0
        %1050 = vmatprep.mubr.bf16.mxu0 %v771
        %1051 = vmatmul.mubr.bf16.gmra.mrb[0].mxu0 %v770
        %v1052 = vpop.f32.mrb[0].mxu0
        %v1053 = vadd.f32 0.0, %v1052
        %v1054 = vpop.f32.mrb[0].mxu0
        %v1055 = vpop.f32.mrb[0].mxu0
        %v1056 = vadd.f32 0.0, %v1055
        %v1057 = vpop.f32.mrb[0].mxu0
        %1058 = vmatprep.mubr.bf16.mxu0 %v773
        %1059 = vmatmul.mubr.bf16.gmra.mrb[0].mxu0 %v772
        %v1060 = vpop.f32.mrb[0].mxu0
        %v1061 = vadd.f32 0.0, %v1060
        %v1062 = vpop.f32.mrb[0].mxu0
        %v1063 = vpop.f32.mrb[0].mxu0
        %v1064 = vadd.f32 0.0, %v1063
        %v1065 = vpop.f32.mrb[0].mxu0
        %1066 = vmatprep.mubr.bf16.mxu0 %v775
        %1067 = vmatmul.mubr.bf16.gmra.mrb[0].mxu0 %v774
        %v1068 = vpop.f32.mrb[0].mxu0
        %v1069 = vadd.f32 0.0, %v1068
        %v1070 = vpop.f32.mrb[0].mxu0
        %v1071 = vpop.f32.mrb[0].mxu0
        %v1072 = vadd.f32 0.0, %v1071
        %v1073 = vpop.f32.mrb[0].mxu0
        %1074 = vmatprep.mubr.bf16.mxu0 %v777
        %1075 = vmatmul.mubr.bf16.gmra.mrb[0].mxu0 %v776
        %v1076 = vpop.f32.mrb[0].mxu0
        %v1077 = vadd.f32 0.0, %v1076
        %v1078 = vpop.f32.mrb[0].mxu0
        %v1079 = vpop.f32.mrb[0].mxu0
        %v1080 = vadd.f32 0.0, %v1079
        %v1081 = vpop.f32.mrb[0].mxu0
        %1082 = vmatprep.mubr.bf16.mxu0 %v779
        %1083 = vmatmul.mubr.bf16.gmra.mrb[0].mxu0 %v778
        %v1084 = vpop.f32.mrb[0].mxu0
        %v1085 = vadd.f32 0.0, %v1084
        %v1086 = vpop.f32.mrb[0].mxu0
        %v1087 = vpop.f32.mrb[0].mxu0
        %v1088 = vadd.f32 0.0, %v1087
        %v1089 = vpop.f32.mrb[0].mxu0
        %1090 = vmatprep.mubr.bf16.mxu0 %v781
        %1091 = vmatmul.mubr.bf16.gmra.mrb[0].mxu0 %v780
        %v1092 = vpop.f32.mrb[0].mxu0
        %v1093 = vadd.f32 0.0, %v1092
        %v1094 = vpop.f32.mrb[0].mxu0
        %v1095 = vpop.f32.mrb[0].mxu0
        %v1096 = vadd.f32 0.0, %v1095
        %v1097 = vpop.f32.mrb[0].mxu0
        %1098 = vmatprep.mubr.bf16.mxu0 %v783
        %1099 = vmatmul.mubr.bf16.gmra.mrb[0].mxu0 %v782
        %v1100 = vpop.f32.mrb[0].mxu0
        %v1101 = vadd.f32 0.0, %v1100
        %v1102 = vpop.f32.mrb[0].mxu0
        %v1103 = vpop.f32.mrb[0].mxu0
        %v1104 = vadd.f32 0.0, %v1103
        %v1105 = vpop.f32.mrb[0].mxu0
        %1106 = vmatprep.mubr.bf16.mxu0 %v785
        %1107 = vmatmul.mubr.bf16.gmra.mrb[0].mxu0 %v784
        %v1108 = vpop.f32.mrb[0].mxu0
        %v1109 = vadd.f32 0.0, %v1108
        %v1110 = vpop.f32.mrb[0].mxu0
        %v1111 = vpop.f32.mrb[0].mxu0
        %v1112 = vadd.f32 0.0, %v1111
        %v1113 = vpop.f32.mrb[0].mxu0
        %1114 = vmatprep.mubr.bf16.mxu0 %v787
        %1115 = vmatmul.mubr.bf16.gmra.mrb[0].mxu0 %v786
        %v1116 = vpop.f32.mrb[0].mxu0
        %v1117 = vadd.f32 0.0, %v1116
        %v1118 = vpop.f32.mrb[0].mxu0
        %v1119 = vpop.f32.mrb[0].mxu0
        %v1120 = vadd.f32 0.0, %v1119
        %v1121 = vpop.f32.mrb[0].mxu0
        %1122 = vmatprep.mubr.bf16.mxu0 %v789
        %1123 = vmatmul.mubr.bf16.gmra.mrb[0].mxu0 %v788
        %v1124 = vpop.f32.mrb[0].mxu0
        %v1125 = vadd.f32 0.0, %v1124
        %v1126 = vpop.f32.mrb[0].mxu0
        %v1127 = vpop.f32.mrb[0].mxu0
        %v1128 = vadd.f32 0.0, %v1127
        %v1129 = vpop.f32.mrb[0].mxu0
        %1130 = vmatprep.mubr.bf16.mxu0 %v791
        %1131 = vmatmul.mubr.bf16.gmra.mrb[0].mxu0 %v790
        %v1132 = vpop.f32.mrb[0].mxu0
        %v1133 = vadd.f32 0.0, %v1132
        %v1134 = vpop.f32.mrb[0].mxu0
        %v1135 = vpop.f32.mrb[0].mxu0
        %v1136 = vadd.f32 0.0, %v1135
        %v1137 = vpop.f32.mrb[0].mxu0
        %1138 = vmatprep.mubr.bf16.mxu0 %v793
        %1139 = vmatmul.mubr.bf16.gmra.mrb[0].mxu0 %v792
        %v1140 = vpop.f32.mrb[0].mxu0
        %v1141 = vadd.f32 0.0, %v1140
        %v1142 = vpop.f32.mrb[0].mxu0
        %v1143 = vpop.f32.mrb[0].mxu0
        %v1144 = vadd.f32 0.0, %v1143
        %v1145 = vpop.f32.mrb[0].mxu0
        %1146 = vmatprep.mubr.bf16.mxu0 %v795
        %1147 = vmatmul.mubr.bf16.gmra.mrb[0].mxu0 %v794
        %v1148 = vpop.f32.mrb[0].mxu0
        %v1149 = vadd.f32 0.0, %v1148
        %v1150 = vpop.f32.mrb[0].mxu0
        %v1151 = vpop.f32.mrb[0].mxu0
        %v1152 = vadd.f32 0.0, %v1151
        %v1153 = vpop.f32.mrb[0].mxu0
        %1154 = vmatprep.mubr.bf16.mxu0 %v797
        %1155 = vmatmul.mubr.bf16.gmra.mrb[0].mxu0 %v796
        %v1156 = vpop.f32.mrb[0].mxu0
        %v1157 = vadd.f32 0.0, %v1156
        %v1158 = vpop.f32.mrb[0].mxu0
        %v1159 = vpop.f32.mrb[0].mxu0
        %v1160 = vadd.f32 0.0, %v1159
        %v1161 = vpop.f32.mrb[0].mxu0
        %1162 = vmatprep.mubr.bf16.mxu0 %v799
        %1163 = vmatmul.mubr.bf16.gmra.mrb[0].mxu0 %v798
        %v1164 = vpop.f32.mrb[0].mxu0
        %v1165 = vadd.f32 0.0, %v1164
        %v1166 = vpop.f32.mrb[0].mxu0
        %v1167 = vpop.f32.mrb[0].mxu0
        %v1168 = vadd.f32 0.0, %v1167
        %v1169 = vpop.f32.mrb[0].mxu0
        %1170 = vmatprep.mubr.bf16.mxu0 %v801
        %1171 = vmatmul.mubr.bf16.gmra.mrb[0].mxu0 %v800
        %v1172 = vpop.f32.mrb[0].mxu0
        %v1173 = vadd.f32 0.0, %v1172
        %v1174 = vpop.f32.mrb[0].mxu0
        %v1175 = vpop.f32.mrb[0].mxu0
        %v1176 = vadd.f32 0.0, %v1175
        %v1177 = vpop.f32.mrb[0].mxu0
        %1178 = vmatprep.mubr.bf16.mxu0 %v803
        %1179 = vmatmul.mubr.bf16.gmra.mrb[0].mxu0 %v802
        %v1180 = vpop.f32.mrb[0].mxu0
        %v1181 = vadd.f32 0.0, %v1180
        %v1182 = vpop.f32.mrb[0].mxu0
        %v1183 = vpop.f32.mrb[0].mxu0
        %v1184 = vadd.f32 0.0, %v1183
        %v1185 = vpop.f32.mrb[0].mxu0
        %1186 = vmatprep.mubr.bf16.mxu0 %v805
        %1187 = vmatmul.mubr.bf16.gmra.mrb[0].mxu0 %v804
        %v1188 = vpop.f32.mrb[0].mxu0
        %v1189 = vadd.f32 0.0, %v1188
        %v1190 = vpop.f32.mrb[0].mxu0
        %v1191 = vpop.f32.mrb[0].mxu0
        %v1192 = vadd.f32 0.0, %v1191
        %v1193 = vpop.f32.mrb[0].mxu0
        %1194 = vmatprep.mubr.bf16.mxu0 %v807
        %1195 = vmatmul.mubr.bf16.gmra.mrb[0].mxu0 %v806
        %v1196 = vpop.f32.mrb[0].mxu0
        %v1197 = vadd.f32 0.0, %v1196
        %v1198 = vpop.f32.mrb[0].mxu0
        %v1199 = vpop.f32.mrb[0].mxu0
        %v1200 = vadd.f32 0.0, %v1199
        %v1201 = vpop.f32.mrb[0].mxu0
        %1202 = vmatprep.mubr.bf16.mxu0 %v809
        %1203 = vmatmul.mubr.bf16.gmra.mrb[0].mxu0 %v808
        %v1204 = vpop.f32.mrb[0].mxu0
        %v1205 = vadd.f32 0.0, %v1204
        %v1206 = vpop.f32.mrb[0].mxu0
        %v1207 = vpop.f32.mrb[0].mxu0
        %v1208 = vadd.f32 0.0, %v1207
        %v1209 = vpop.f32.mrb[0].mxu0
        %1210 = vmatprep.mubr.bf16.mxu0 %v811
        %1211 = vmatmul.mubr.bf16.gmra.mrb[0].mxu0 %v810
        %v1212 = vpop.f32.mrb[0].mxu0
        %v1213 = vadd.f32 0.0, %v1212
        %v1214 = vpop.f32.mrb[0].mxu0
        %v1215 = vpop.f32.mrb[0].mxu0
        %v1216 = vadd.f32 0.0, %v1215
        %v1217 = vpop.f32.mrb[0].mxu0
        %1218 = vmatprep.mubr.bf16.mxu0 %v813
        %1219 = vmatmul.mubr.bf16.gmra.mrb[0].mxu0 %v812
        %v1220 = vpop.f32.mrb[0].mxu0
        %v1221 = vadd.f32 0.0, %v1220
        %v1222 = vpop.f32.mrb[0].mxu0
        %v1223 = vpop.f32.mrb[0].mxu0
        %v1224 = vadd.f32 0.0, %v1223
        %v1225 = vpop.f32.mrb[0].mxu0
        %1226 = vmatprep.mubr.bf16.mxu0 %v815
        %1227 = vmatmul.mubr.bf16.gmra.mrb[0].mxu0 %v814
        %v1228 = vpop.f32.mrb[0].mxu0
        %v1229 = vadd.f32 0.0, %v1228
        %v1230 = vpop.f32.mrb[0].mxu0
        %v1231 = vpop.f32.mrb[0].mxu0
        %v1232 = vadd.f32 0.0, %v1231
        %v1233 = vpop.f32.mrb[0].mxu0
        %1234 = vmatprep.mubr.bf16.mxu0 %v817
        %1235 = vmatmul.mubr.bf16.gmra.mrb[0].mxu0 %v816
        %v1236 = vpop.f32.mrb[0].mxu0
        %v1237 = vadd.f32 0.0, %v1236
        %v1238 = vpop.f32.mrb[0].mxu0
        %v1239 = vpop.f32.mrb[0].mxu0
        %v1240 = vadd.f32 0.0, %v1239
        %v1241 = vpop.f32.mrb[0].mxu0
        %1242 = vmatprep.mubr.bf16.mxu0 %v819
        %1243 = vmatmul.mubr.bf16.gmra.mrb[0].mxu0 %v818
        %v1244 = vpop.f32.mrb[0].mxu0
        %v1245 = vadd.f32 0.0, %v1244
        %v1246 = vpop.f32.mrb[0].mxu0
        %v1247 = vpop.f32.mrb[0].mxu0
        %v1248 = vadd.f32 0.0, %v1247
        %v1249 = vpop.f32.mrb[0].mxu0
        %1250 = vmatprep.mubr.bf16.mxu0 %v821
        %1251 = vmatmul.mubr.bf16.gmra.mrb[0].mxu0 %v820
        %v1252 = vpop.f32.mrb[0].mxu0
        %v1253 = vadd.f32 0.0, %v1252
        %v1254 = vpop.f32.mrb[0].mxu0
        %v1255 = vpop.f32.mrb[0].mxu0
        %v1256 = vadd.f32 0.0, %v1255
        %v1257 = vpop.f32.mrb[0].mxu0
        %1258 = vmatprep.mubr.bf16.mxu0 %v823
        %1259 = vmatmul.mubr.bf16.gmra.mrb[0].mxu0 %v822
        %v1260 = vpop.f32.mrb[0].mxu0
        %v1261 = vadd.f32 0.0, %v1260
        %v1262 = vpop.f32.mrb[0].mxu0
        %v1263 = vpop.f32.mrb[0].mxu0
        %v1264 = vadd.f32 0.0, %v1263
        %v1265 = vpop.f32.mrb[0].mxu0
        %1266 = vmatprep.mubr.bf16.mxu0 %v825
        %1267 = vmatmul.mubr.bf16.gmra.mrb[0].mxu0 %v824
        %v1268 = vpop.f32.mrb[0].mxu0
        %v1269 = vadd.f32 0.0, %v1268
        %v1270 = vpop.f32.mrb[0].mxu0
        %v1271 = vpop.f32.mrb[0].mxu0
        %v1272 = vadd.f32 0.0, %v1271
        %v1273 = vpop.f32.mrb[0].mxu0
        %1274 = vdwg.mxu0
        %v1275 = vadd.f32 %v410, %v1021
        %v1276 = vadd.f32 %v411, %v1024
        %v1277 = vadd.f32 %v412, %v1029
        %v1278 = vadd.f32 %v413, %v1032
        %v1279 = vadd.f32 %v414, %v1037
        %v1280 = vadd.f32 %v415, %v1040
        %v1281 = vadd.f32 %v416, %v1045
        %v1282 = vadd.f32 %v417, %v1048
        %v1283 = vadd.f32 %v418, %v1053
        %v1284 = vadd.f32 %v419, %v1056
        %v1285 = vadd.f32 %v420, %v1061
        %v1286 = vadd.f32 %v421, %v1064
        %v1287 = vadd.f32 %v422, %v1069
        %v1288 = vadd.f32 %v423, %v1072
        %v1289 = vadd.f32 %v424, %v1077
        %v1290 = vadd.f32 %v425, %v1080
        %v1291 = vadd.f32 %v426, %v1085
        %v1292 = vadd.f32 %v427, %v1088
        %v1293 = vadd.f32 %v428, %v1093
        %v1294 = vadd.f32 %v429, %v1096
        %v1295 = vadd.f32 %v430, %v1101
        %v1296 = vadd.f32 %v431, %v1104
        %v1297 = vadd.f32 %v432, %v1109
        %v1298 = vadd.f32 %v433, %v1112
        %v1299 = vadd.f32 %v434, %v1117
        %v1300 = vadd.f32 %v435, %v1120
        %v1301 = vadd.f32 %v436, %v1125
        %v1302 = vadd.f32 %v437, %v1128
        %v1303 = vadd.f32 %v438, %v1133
        %v1304 = vadd.f32 %v439, %v1136
        %v1305 = vadd.f32 %v440, %v1141
        %v1306 = vadd.f32 %v441, %v1144
        %v1307 = vadd.f32 %v442, %v1149
        %v1308 = vadd.f32 %v443, %v1152
        %v1309 = vadd.f32 %v444, %v1157
        %v1310 = vadd.f32 %v445, %v1160
        %v1311 = vadd.f32 %v446, %v1165
        %v1312 = vadd.f32 %v447, %v1168
        %v1313 = vadd.f32 %v448, %v1173
        %v1314 = vadd.f32 %v449, %v1176
        %v1315 = vadd.f32 %v450, %v1181
        %v1316 = vadd.f32 %v451, %v1184
        %v1317 = vadd.f32 %v452, %v1189
        %v1318 = vadd.f32 %v453, %v1192
        %v1319 = vadd.f32 %v454, %v1197
        %v1320 = vadd.f32 %v455, %v1200
        %v1321 = vadd.f32 %v456, %v1205
        %v1322 = vadd.f32 %v457, %v1208
        %v1323 = vadd.f32 %v458, %v1213
        %v1324 = vadd.f32 %v459, %v1216
        %v1325 = vadd.f32 %v460, %v1221
        %v1326 = vadd.f32 %v461, %v1224
        %v1327 = vadd.f32 %v462, %v1229
        %v1328 = vadd.f32 %v463, %v1232
        %v1329 = vadd.f32 %v464, %v1237
        %v1330 = vadd.f32 %v465, %v1240
        %v1331 = vadd.f32 %v466, %v1245
        %v1332 = vadd.f32 %v467, %v1248
        %v1333 = vadd.f32 %v468, %v1253
        %v1334 = vadd.f32 %v469, %v1256
        %v1335 = vadd.f32 %v470, %v1261
        %v1336 = vadd.f32 %v471, %v1264
        %v1337 = vadd.f32 %v472, %v1269
        %v1338 = vadd.f32 %v473, %v1272
        %1339 = vst [vmem:[#allocation2] sm:$0xff] %v1275
        %1340 = vst [vmem:[#allocation2 + $0x8] sm:$0xff] %v1276
        %1341 = vst [vmem:[#allocation2 + $0x10] sm:$0xff] %v1277
        %1342 = vst [vmem:[#allocation2 + $0x18] sm:$0xff] %v1278
        %1343 = vst [vmem:[#allocation2 + $0x20] sm:$0xff] %v1279
        %1344 = vst [vmem:[#allocation2 + $0x28] sm:$0xff] %v1280
        %1345 = vst [vmem:[#allocation2 + $0x30] sm:$0xff] %v1281
        %1346 = vst [vmem:[#allocation2 + $0x38] sm:$0xff] %v1282
        %1347 = vst [vmem:[#allocation2 + $0x40] sm:$0xff] %v1283
        %1348 = vst [vmem:[#allocation2 + $0x48] sm:$0xff] %v1284
        %1349 = vst [vmem:[#allocation2 + $0x50] sm:$0xff] %v1285
        %1350 = vst [vmem:[#allocation2 + $0x58] sm:$0xff] %v1286
        %1351 = vst [vmem:[#allocation2 + $0x60] sm:$0xff] %v1287
        %1352 = vst [vmem:[#allocation2 + $0x68] sm:$0xff] %v1288
        %1353 = vst [vmem:[#allocation2 + $0x70] sm:$0xff] %v1289
        %1354 = vst [vmem:[#allocation2 + $0x78] sm:$0xff] %v1290
        %1355 = vst [vmem:[#allocation2 + $0x80] sm:$0xff] %v1291
        %1356 = vst [vmem:[#allocation2 + $0x88] sm:$0xff] %v1292
        %1357 = vst [vmem:[#allocation2 + $0x90] sm:$0xff] %v1293
        %1358 = vst [vmem:[#allocation2 + $0x98] sm:$0xff] %v1294
        %1359 = vst [vmem:[#allocation2 + $0xa0] sm:$0xff] %v1295
        %1360 = vst [vmem:[#allocation2 + $0xa8] sm:$0xff] %v1296
        %1361 = vst [vmem:[#allocation2 + $0xb0] sm:$0xff] %v1297
        %1362 = vst [vmem:[#allocation2 + $0xb8] sm:$0xff] %v1298
        %1363 = vst [vmem:[#allocation2 + $0xc0] sm:$0xff] %v1299
        %1364 = vst [vmem:[#allocation2 + $0xc8] sm:$0xff] %v1300
        %1365 = vst [vmem:[#allocation2 + $0xd0] sm:$0xff] %v1301
        %1366 = vst [vmem:[#allocation2 + $0xd8] sm:$0xff] %v1302
        %1367 = vst [vmem:[#allocation2 + $0xe0] sm:$0xff] %v1303
        %1368 = vst [vmem:[#allocation2 + $0xe8] sm:$0xff] %v1304
        %1369 = vst [vmem:[#allocation2 + $0xf0] sm:$0xff] %v1305
        %1370 = vst [vmem:[#allocation2 + $0xf8] sm:$0xff] %v1306
        %1371 = vst [vmem:[#allocation2 + $0x100] sm:$0xff] %v1307
        %1372 = vst [vmem:[#allocation2 + $0x108] sm:$0xff] %v1308
        %1373 = vst [vmem:[#allocation2 + $0x110] sm:$0xff] %v1309
        %1374 = vst [vmem:[#allocation2 + $0x118] sm:$0xff] %v1310
        %1375 = vst [vmem:[#allocation2 + $0x120] sm:$0xff] %v1311
        %1376 = vst [vmem:[#allocation2 + $0x128] sm:$0xff] %v1312
        %1377 = vst [vmem:[#allocation2 + $0x130] sm:$0xff] %v1313
        %1378 = vst [vmem:[#allocation2 + $0x138] sm:$0xff] %v1314
        %1379 = vst [vmem:[#allocation2 + $0x140] sm:$0xff] %v1315
        %1380 = vst [vmem:[#allocation2 + $0x148] sm:$0xff] %v1316
        %1381 = vst [vmem:[#allocation2 + $0x150] sm:$0xff] %v1317
        %1382 = vst [vmem:[#allocation2 + $0x158] sm:$0xff] %v1318
        %1383 = vst [vmem:[#allocation2 + $0x160] sm:$0xff] %v1319
        %1384 = vst [vmem:[#allocation2 + $0x168] sm:$0xff] %v1320
        %1385 = vst [vmem:[#allocation2 + $0x170] sm:$0xff] %v1321
        %1386 = vst [vmem:[#allocation2 + $0x178] sm:$0xff] %v1322
        %1387 = vst [vmem:[#allocation2 + $0x180] sm:$0xff] %v1323
        %1388 = vst [vmem:[#allocation2 + $0x188] sm:$0xff] %v1324
        %1389 = vst [vmem:[#allocation2 + $0x190] sm:$0xff] %v1325
        %1390 = vst [vmem:[#allocation2 + $0x198] sm:$0xff] %v1326
        %1391 = vst [vmem:[#allocation2 + $0x1a0] sm:$0xff] %v1327
        %1392 = vst [vmem:[#allocation2 + $0x1a8] sm:$0xff] %v1328
        %1393 = vst [vmem:[#allocation2 + $0x1b0] sm:$0xff] %v1329
        %1394 = vst [vmem:[#allocation2 + $0x1b8] sm:$0xff] %v1330
        %1395 = vst [vmem:[#allocation2 + $0x1c0] sm:$0xff] %v1331
        %1396 = vst [vmem:[#allocation2 + $0x1c8] sm:$0xff] %v1332
        %1397 = vst [vmem:[#allocation2 + $0x1d0] sm:$0xff] %v1333
        %1398 = vst [vmem:[#allocation2 + $0x1d8] sm:$0xff] %v1334
        %1399 = vst [vmem:[#allocation2 + $0x1e0] sm:$0xff] %v1335
        %1400 = vst [vmem:[#allocation2 + $0x1e8] sm:$0xff] %v1336
        %1401 = vst [vmem:[#allocation2 + $0x1f0] sm:$0xff] %v1337
        %1402 = vst [vmem:[#allocation2 + $0x1f8] sm:$0xff] %v1338
        // Predicated region
        $region53: #{tpu_custom_call.1} parent=39 // pred_check
          %p1403 = pneg %p342
        $region54: #{tpu_custom_call.1} parent=39 // pred_check_branch
          %1405 = sbr.rel (%p1403) target = $region56
        $region55: #{tpu_custom_call.1} parent=39 // pred_region
          %v1406 = vld [vmem:[#allocation2] sm:$0xff]
          %v1407 = vld [vmem:[#allocation2 + $0x8] sm:$0xff]
          %v1408 = vld [vmem:[#allocation2 + $0x10] sm:$0xff]
          %v1409 = vld [vmem:[#allocation2 + $0x18] sm:$0xff]
          %v1410 = vld [vmem:[#allocation2 + $0x20] sm:$0xff]
          %v1411 = vld [vmem:[#allocation2 + $0x28] sm:$0xff]
          %v1412 = vld [vmem:[#allocation2 + $0x30] sm:$0xff]
          %v1413 = vld [vmem:[#allocation2 + $0x38] sm:$0xff]
          %v1414 = vld [vmem:[#allocation2 + $0x40] sm:$0xff]
          %v1415 = vld [vmem:[#allocation2 + $0x48] sm:$0xff]
          %v1416 = vld [vmem:[#allocation2 + $0x50] sm:$0xff]
          %v1417 = vld [vmem:[#allocation2 + $0x58] sm:$0xff]
          %v1418 = vld [vmem:[#allocation2 + $0x60] sm:$0xff]
          %v1419 = vld [vmem:[#allocation2 + $0x68] sm:$0xff]
          %v1420 = vld [vmem:[#allocation2 + $0x70] sm:$0xff]
          %v1421 = vld [vmem:[#allocation2 + $0x78] sm:$0xff]
          %v1422 = vld [vmem:[#allocation2 + $0x80] sm:$0xff]
          %v1423 = vld [vmem:[#allocation2 + $0x88] sm:$0xff]
          %v1424 = vld [vmem:[#allocation2 + $0x90] sm:$0xff]
          %v1425 = vld [vmem:[#allocation2 + $0x98] sm:$0xff]
          %v1426 = vld [vmem:[#allocation2 + $0xa0] sm:$0xff]
          %v1427 = vld [vmem:[#allocation2 + $0xa8] sm:$0xff]
          %v1428 = vld [vmem:[#allocation2 + $0xb0] sm:$0xff]
          %v1429 = vld [vmem:[#allocation2 + $0xb8] sm:$0xff]
          %v1430 = vld [vmem:[#allocation2 + $0xc0] sm:$0xff]
          %v1431 = vld [vmem:[#allocation2 + $0xc8] sm:$0xff]
          %v1432 = vld [vmem:[#allocation2 + $0xd0] sm:$0xff]
          %v1433 = vld [vmem:[#allocation2 + $0xd8] sm:$0xff]
          %v1434 = vld [vmem:[#allocation2 + $0xe0] sm:$0xff]
          %v1435 = vld [vmem:[#allocation2 + $0xe8] sm:$0xff]
          %v1436 = vld [vmem:[#allocation2 + $0xf0] sm:$0xff]
          %v1437 = vld [vmem:[#allocation2 + $0xf8] sm:$0xff]
          %v1438 = vld [vmem:[#allocation2 + $0x100] sm:$0xff]
          %v1439 = vld [vmem:[#allocation2 + $0x108] sm:$0xff]
          %v1440 = vld [vmem:[#allocation2 + $0x110] sm:$0xff]
          %v1441 = vld [vmem:[#allocation2 + $0x118] sm:$0xff]
          %v1442 = vld [vmem:[#allocation2 + $0x120] sm:$0xff]
          %v1443 = vld [vmem:[#allocation2 + $0x128] sm:$0xff]
          %v1444 = vld [vmem:[#allocation2 + $0x130] sm:$0xff]
          %v1445 = vld [vmem:[#allocation2 + $0x138] sm:$0xff]
          %v1446 = vld [vmem:[#allocation2 + $0x140] sm:$0xff]
          %v1447 = vld [vmem:[#allocation2 + $0x148] sm:$0xff]
          %v1448 = vld [vmem:[#allocation2 + $0x150] sm:$0xff]
          %v1449 = vld [vmem:[#allocation2 + $0x158] sm:$0xff]
          %v1450 = vld [vmem:[#allocation2 + $0x160] sm:$0xff]
          %v1451 = vld [vmem:[#allocation2 + $0x168] sm:$0xff]
          %v1452 = vld [vmem:[#allocation2 + $0x170] sm:$0xff]
          %v1453 = vld [vmem:[#allocation2 + $0x178] sm:$0xff]
          %v1454 = vld [vmem:[#allocation2 + $0x180] sm:$0xff]
          %v1455 = vld [vmem:[#allocation2 + $0x188] sm:$0xff]
          %v1456 = vld [vmem:[#allocation2 + $0x190] sm:$0xff]
          %v1457 = vld [vmem:[#allocation2 + $0x198] sm:$0xff]
          %v1458 = vld [vmem:[#allocation2 + $0x1a0] sm:$0xff]
          %v1459 = vld [vmem:[#allocation2 + $0x1a8] sm:$0xff]
          %v1460 = vld [vmem:[#allocation2 + $0x1b0] sm:$0xff]
          %v1461 = vld [vmem:[#allocation2 + $0x1b8] sm:$0xff]
          %v1462 = vld [vmem:[#allocation2 + $0x1c0] sm:$0xff]
          %v1463 = vld [vmem:[#allocation2 + $0x1c8] sm:$0xff]
          %v1464 = vld [vmem:[#allocation2 + $0x1d0] sm:$0xff]
          %v1465 = vld [vmem:[#allocation2 + $0x1d8] sm:$0xff]
          %v1466 = vld [vmem:[#allocation2 + $0x1e0] sm:$0xff]
          %v1467 = vld [vmem:[#allocation2 + $0x1e8] sm:$0xff]
          %v1468 = vld [vmem:[#allocation2 + $0x1f0] sm:$0xff]
          %v1469 = vld [vmem:[#allocation2 + $0x1f8] sm:$0xff]
          %v1470 = vld [vmem:[%s333] sm:$0x1]
          %v1472 = vlaneseq
          %v1473 = vshrl.u32 %v1472, 7
          %v1474 = vsub.s32 0, %v1473
          %v1475 = vrot.slane %v1470, %v1474
          %v1477 = vmul.f32 %v1406, %v1475
          %v1478 = vmul.f32 %v1407, %v1475
          %v1479 = vmul.f32 %v1408, %v1475
          %v1480 = vmul.f32 %v1409, %v1475
          %v1481 = vmul.f32 %v1410, %v1475
          %v1482 = vmul.f32 %v1411, %v1475
          %v1483 = vmul.f32 %v1412, %v1475
          %v1484 = vmul.f32 %v1413, %v1475
          %v1485 = vmul.f32 %v1414, %v1475
          %v1486 = vmul.f32 %v1415, %v1475
          %v1487 = vmul.f32 %v1416, %v1475
          %v1488 = vmul.f32 %v1417, %v1475
          %v1489 = vmul.f32 %v1418, %v1475
          %v1490 = vmul.f32 %v1419, %v1475
          %v1491 = vmul.f32 %v1420, %v1475
          %v1492 = vmul.f32 %v1421, %v1475
          %v1493 = vmul.f32 %v1422, %v1475
          %v1494 = vmul.f32 %v1423, %v1475
          %v1495 = vmul.f32 %v1424, %v1475
          %v1496 = vmul.f32 %v1425, %v1475
          %v1497 = vmul.f32 %v1426, %v1475
          %v1498 = vmul.f32 %v1427, %v1475
          %v1499 = vmul.f32 %v1428, %v1475
          %v1500 = vmul.f32 %v1429, %v1475
          %v1501 = vmul.f32 %v1430, %v1475
          %v1502 = vmul.f32 %v1431, %v1475
          %v1503 = vmul.f32 %v1432, %v1475
          %v1504 = vmul.f32 %v1433, %v1475
          %v1505 = vmul.f32 %v1434, %v1475
          %v1506 = vmul.f32 %v1435, %v1475
          %v1507 = vmul.f32 %v1436, %v1475
          %v1508 = vmul.f32 %v1437, %v1475
          %v1509 = vmul.f32 %v1438, %v1475
          %v1510 = vmul.f32 %v1439, %v1475
          %v1511 = vmul.f32 %v1440, %v1475
          %v1512 = vmul.f32 %v1441, %v1475
          %v1513 = vmul.f32 %v1442, %v1475
          %v1514 = vmul.f32 %v1443, %v1475
          %v1515 = vmul.f32 %v1444, %v1475
          %v1516 = vmul.f32 %v1445, %v1475
          %v1517 = vmul.f32 %v1446, %v1475
          %v1518 = vmul.f32 %v1447, %v1475
          %v1519 = vmul.f32 %v1448, %v1475
          %v1520 = vmul.f32 %v1449, %v1475
          %v1521 = vmul.f32 %v1450, %v1475
          %v1522 = vmul.f32 %v1451, %v1475
          %v1523 = vmul.f32 %v1452, %v1475
          %v1524 = vmul.f32 %v1453, %v1475
          %v1525 = vmul.f32 %v1454, %v1475
          %v1526 = vmul.f32 %v1455, %v1475
          %v1527 = vmul.f32 %v1456, %v1475
          %v1528 = vmul.f32 %v1457, %v1475
          %v1529 = vmul.f32 %v1458, %v1475
          %v1530 = vmul.f32 %v1459, %v1475
          %v1531 = vmul.f32 %v1460, %v1475
          %v1532 = vmul.f32 %v1461, %v1475
          %v1533 = vmul.f32 %v1462, %v1475
          %v1534 = vmul.f32 %v1463, %v1475
          %v1535 = vmul.f32 %v1464, %v1475
          %v1536 = vmul.f32 %v1465, %v1475
          %v1537 = vmul.f32 %v1466, %v1475
          %v1538 = vmul.f32 %v1467, %v1475
          %v1539 = vmul.f32 %v1468, %v1475
          %v1540 = vmul.f32 %v1469, %v1475
          %v1541 = vld [vmem:[%s336] sm:$0x1]
          %v1543 = vlaneseq
          %v1544 = vshrl.u32 %v1543, 7
          %v1545 = vsub.s32 0, %v1544
          %v1546 = vrot.slane %v1541, %v1545
          %v1548 = vadd.f32 %v1477, %v1546
          %v1549 = vadd.f32 %v1478, %v1546
          %v1550 = vadd.f32 %v1479, %v1546
          %v1551 = vadd.f32 %v1480, %v1546
          %v1552 = vadd.f32 %v1481, %v1546
          %v1553 = vadd.f32 %v1482, %v1546
          %v1554 = vadd.f32 %v1483, %v1546
          %v1555 = vadd.f32 %v1484, %v1546
          %v1556 = vadd.f32 %v1485, %v1546
          %v1557 = vadd.f32 %v1486, %v1546
          %v1558 = vadd.f32 %v1487, %v1546
          %v1559 = vadd.f32 %v1488, %v1546
          %v1560 = vadd.f32 %v1489, %v1546
          %v1561 = vadd.f32 %v1490, %v1546
          %v1562 = vadd.f32 %v1491, %v1546
          %v1563 = vadd.f32 %v1492, %v1546
          %v1564 = vadd.f32 %v1493, %v1546
          %v1565 = vadd.f32 %v1494, %v1546
          %v1566 = vadd.f32 %v1495, %v1546
          %v1567 = vadd.f32 %v1496, %v1546
          %v1568 = vadd.f32 %v1497, %v1546
          %v1569 = vadd.f32 %v1498, %v1546
          %v1570 = vadd.f32 %v1499, %v1546
          %v1571 = vadd.f32 %v1500, %v1546
          %v1572 = vadd.f32 %v1501, %v1546
          %v1573 = vadd.f32 %v1502, %v1546
          %v1574 = vadd.f32 %v1503, %v1546
          %v1575 = vadd.f32 %v1504, %v1546
          %v1576 = vadd.f32 %v1505, %v1546
          %v1577 = vadd.f32 %v1506, %v1546
          %v1578 = vadd.f32 %v1507, %v1546
          %v1579 = vadd.f32 %v1508, %v1546
          %v1580 = vadd.f32 %v1509, %v1546
          %v1581 = vadd.f32 %v1510, %v1546
          %v1582 = vadd.f32 %v1511, %v1546
          %v1583 = vadd.f32 %v1512, %v1546
          %v1584 = vadd.f32 %v1513, %v1546
          %v1585 = vadd.f32 %v1514, %v1546
          %v1586 = vadd.f32 %v1515, %v1546
          %v1587 = vadd.f32 %v1516, %v1546
          %v1588 = vadd.f32 %v1517, %v1546
          %v1589 = vadd.f32 %v1518, %v1546
          %v1590 = vadd.f32 %v1519, %v1546
          %v1591 = vadd.f32 %v1520, %v1546
          %v1592 = vadd.f32 %v1521, %v1546
          %v1593 = vadd.f32 %v1522, %v1546
          %v1594 = vadd.f32 %v1523, %v1546
          %v1595 = vadd.f32 %v1524, %v1546
          %v1596 = vadd.f32 %v1525, %v1546
          %v1597 = vadd.f32 %v1526, %v1546
          %v1598 = vadd.f32 %v1527, %v1546
          %v1599 = vadd.f32 %v1528, %v1546
          %v1600 = vadd.f32 %v1529, %v1546
          %v1601 = vadd.f32 %v1530, %v1546
          %v1602 = vadd.f32 %v1531, %v1546
          %v1603 = vadd.f32 %v1532, %v1546
          %v1604 = vadd.f32 %v1533, %v1546
          %v1605 = vadd.f32 %v1534, %v1546
          %v1606 = vadd.f32 %v1535, %v1546
          %v1607 = vadd.f32 %v1536, %v1546
          %v1608 = vadd.f32 %v1537, %v1546
          %v1609 = vadd.f32 %v1538, %v1546
          %v1610 = vadd.f32 %v1539, %v1546
          %v1611 = vadd.f32 %v1540, %v1546
          %v1612 = vld [vmem:[%s339] sm:$0x1]
          %v1614 = vlaneseq
          %v1615 = vshrl.u32 %v1614, 7
          %v1616 = vsub.s32 0, %v1615
          %v1617 = vrot.slane %v1612, %v1616
          %v1619 = vmul.f32 %v1548, %v1617
          %v1620 = vmul.f32 %v1549, %v1617
          %v1621 = vmul.f32 %v1550, %v1617
          %v1622 = vmul.f32 %v1551, %v1617
          %v1623 = vmul.f32 %v1552, %v1617
          %v1624 = vmul.f32 %v1553, %v1617
          %v1625 = vmul.f32 %v1554, %v1617
          %v1626 = vmul.f32 %v1555, %v1617
          %v1627 = vmul.f32 %v1556, %v1617
          %v1628 = vmul.f32 %v1557, %v1617
          %v1629 = vmul.f32 %v1558, %v1617
          %v1630 = vmul.f32 %v1559, %v1617
          %v1631 = vmul.f32 %v1560, %v1617
          %v1632 = vmul.f32 %v1561, %v1617
          %v1633 = vmul.f32 %v1562, %v1617
          %v1634 = vmul.f32 %v1563, %v1617
          %v1635 = vmul.f32 %v1564, %v1617
          %v1636 = vmul.f32 %v1565, %v1617
          %v1637 = vmul.f32 %v1566, %v1617
          %v1638 = vmul.f32 %v1567, %v1617
          %v1639 = vmul.f32 %v1568, %v1617
          %v1640 = vmul.f32 %v1569, %v1617
          %v1641 = vmul.f32 %v1570, %v1617
          %v1642 = vmul.f32 %v1571, %v1617
          %v1643 = vmul.f32 %v1572, %v1617
          %v1644 = vmul.f32 %v1573, %v1617
          %v1645 = vmul.f32 %v1574, %v1617
          %v1646 = vmul.f32 %v1575, %v1617
          %v1647 = vmul.f32 %v1576, %v1617
          %v1648 = vmul.f32 %v1577, %v1617
          %v1649 = vmul.f32 %v1578, %v1617
          %v1650 = vmul.f32 %v1579, %v1617
          %v1651 = vmul.f32 %v1580, %v1617
          %v1652 = vmul.f32 %v1581, %v1617
          %v1653 = vmul.f32 %v1582, %v1617
          %v1654 = vmul.f32 %v1583, %v1617
          %v1655 = vmul.f32 %v1584, %v1617
          %v1656 = vmul.f32 %v1585, %v1617
          %v1657 = vmul.f32 %v1586, %v1617
          %v1658 = vmul.f32 %v1587, %v1617
          %v1659 = vmul.f32 %v1588, %v1617
          %v1660 = vmul.f32 %v1589, %v1617
          %v1661 = vmul.f32 %v1590, %v1617
          %v1662 = vmul.f32 %v1591, %v1617
          %v1663 = vmul.f32 %v1592, %v1617
          %v1664 = vmul.f32 %v1593, %v1617
          %v1665 = vmul.f32 %v1594, %v1617
          %v1666 = vmul.f32 %v1595, %v1617
          %v1667 = vmul.f32 %v1596, %v1617
          %v1668 = vmul.f32 %v1597, %v1617
          %v1669 = vmul.f32 %v1598, %v1617
          %v1670 = vmul.f32 %v1599, %v1617
          %v1671 = vmul.f32 %v1600, %v1617
          %v1672 = vmul.f32 %v1601, %v1617
          %v1673 = vmul.f32 %v1602, %v1617
          %v1674 = vmul.f32 %v1603, %v1617
          %v1675 = vmul.f32 %v1604, %v1617
          %v1676 = vmul.f32 %v1605, %v1617
          %v1677 = vmul.f32 %v1606, %v1617
          %v1678 = vmul.f32 %v1607, %v1617
          %v1679 = vmul.f32 %v1608, %v1617
          %v1680 = vmul.f32 %v1609, %v1617
          %v1681 = vmul.f32 %v1610, %v1617
          %v1682 = vmul.f32 %v1611, %v1617
          %v1683 = vmax.f32 %v1548, %v1619
          %v1684 = vmax.f32 %v1549, %v1620
          %v1685 = vmax.f32 %v1550, %v1621
          %v1686 = vmax.f32 %v1551, %v1622
          %v1687 = vmax.f32 %v1552, %v1623
          %v1688 = vmax.f32 %v1553, %v1624
          %v1689 = vmax.f32 %v1554, %v1625
          %v1690 = vmax.f32 %v1555, %v1626
          %v1691 = vmax.f32 %v1556, %v1627
          %v1692 = vmax.f32 %v1557, %v1628
          %v1693 = vmax.f32 %v1558, %v1629
          %v1694 = vmax.f32 %v1559, %v1630
          %v1695 = vmax.f32 %v1560, %v1631
          %v1696 = vmax.f32 %v1561, %v1632
          %v1697 = vmax.f32 %v1562, %v1633
          %v1698 = vmax.f32 %v1563, %v1634
          %v1699 = vmax.f32 %v1564, %v1635
          %v1700 = vmax.f32 %v1565, %v1636
          %v1701 = vmax.f32 %v1566, %v1637
          %v1702 = vmax.f32 %v1567, %v1638
          %v1703 = vmax.f32 %v1568, %v1639
          %v1704 = vmax.f32 %v1569, %v1640
          %v1705 = vmax.f32 %v1570, %v1641
          %v1706 = vmax.f32 %v1571, %v1642
          %v1707 = vmax.f32 %v1572, %v1643
          %v1708 = vmax.f32 %v1573, %v1644
          %v1709 = vmax.f32 %v1574, %v1645
          %v1710 = vmax.f32 %v1575, %v1646
          %v1711 = vmax.f32 %v1576, %v1647
          %v1712 = vmax.f32 %v1577, %v1648
          %v1713 = vmax.f32 %v1578, %v1649
          %v1714 = vmax.f32 %v1579, %v1650
          %v1715 = vmax.f32 %v1580, %v1651
          %v1716 = vmax.f32 %v1581, %v1652
          %v1717 = vmax.f32 %v1582, %v1653
          %v1718 = vmax.f32 %v1583, %v1654
          %v1719 = vmax.f32 %v1584, %v1655
          %v1720 = vmax.f32 %v1585, %v1656
          %v1721 = vmax.f32 %v1586, %v1657
          %v1722 = vmax.f32 %v1587, %v1658
          %v1723 = vmax.f32 %v1588, %v1659
          %v1724 = vmax.f32 %v1589, %v1660
          %v1725 = vmax.f32 %v1590, %v1661
          %v1726 = vmax.f32 %v1591, %v1662
          %v1727 = vmax.f32 %v1592, %v1663
          %v1728 = vmax.f32 %v1593, %v1664
          %v1729 = vmax.f32 %v1594, %v1665
          %v1730 = vmax.f32 %v1595, %v1666
          %v1731 = vmax.f32 %v1596, %v1667
          %v1732 = vmax.f32 %v1597, %v1668
          %v1733 = vmax.f32 %v1598, %v1669
          %v1734 = vmax.f32 %v1599, %v1670
          %v1735 = vmax.f32 %v1600, %v1671
          %v1736 = vmax.f32 %v1601, %v1672
          %v1737 = vmax.f32 %v1602, %v1673
          %v1738 = vmax.f32 %v1603, %v1674
          %v1739 = vmax.f32 %v1604, %v1675
          %v1740 = vmax.f32 %v1605, %v1676
          %v1741 = vmax.f32 %v1606, %v1677
          %v1742 = vmax.f32 %v1607, %v1678
          %v1743 = vmax.f32 %v1608, %v1679
          %v1744 = vmax.f32 %v1609, %v1680
          %v1745 = vmax.f32 %v1610, %v1681
          %v1746 = vmax.f32 %v1611, %v1682
          %v1747 = vpack.c.bf16 %v1684, %v1683
          %v1748 = vpack.c.bf16 %v1686, %v1685
          %v1749 = vpack.c.bf16 %v1688, %v1687
          %v1750 = vpack.c.bf16 %v1690, %v1689
          %v1751 = vpack.c.bf16 %v1692, %v1691
          %v1752 = vpack.c.bf16 %v1694, %v1693
          %v1753 = vpack.c.bf16 %v1696, %v1695
          %v1754 = vpack.c.bf16 %v1698, %v1697
          %v1755 = vpack.c.bf16 %v1700, %v1699
          %v1756 = vpack.c.bf16 %v1702, %v1701
          %v1757 = vpack.c.bf16 %v1704, %v1703
          %v1758 = vpack.c.bf16 %v1706, %v1705
          %v1759 = vpack.c.bf16 %v1708, %v1707
          %v1760 = vpack.c.bf16 %v1710, %v1709
          %v1761 = vpack.c.bf16 %v1712, %v1711
          %v1762 = vpack.c.bf16 %v1714, %v1713
          %v1763 = vpack.c.bf16 %v1716, %v1715
          %v1764 = vpack.c.bf16 %v1718, %v1717
          %v1765 = vpack.c.bf16 %v1720, %v1719
          %v1766 = vpack.c.bf16 %v1722, %v1721
          %v1767 = vpack.c.bf16 %v1724, %v1723
          %v1768 = vpack.c.bf16 %v1726, %v1725
          %v1769 = vpack.c.bf16 %v1728, %v1727
          %v1770 = vpack.c.bf16 %v1730, %v1729
          %v1771 = vpack.c.bf16 %v1732, %v1731
          %v1772 = vpack.c.bf16 %v1734, %v1733
          %v1773 = vpack.c.bf16 %v1736, %v1735
          %v1774 = vpack.c.bf16 %v1738, %v1737
          %v1775 = vpack.c.bf16 %v1740, %v1739
          %v1776 = vpack.c.bf16 %v1742, %v1741
          %v1777 = vpack.c.bf16 %v1744, %v1743
          %v1778 = vpack.c.bf16 %v1746, %v1745
          %v1811 = vunpack.c.l.b16 %v1747
          %v1812 = vunpack.c.h.b16 %v1747
          %v1813 = vunpack.c.l.b16 %v1748
          %v1814 = vunpack.c.h.b16 %v1748
          %v1815 = vunpack.c.l.b16 %v1749
          %v1816 = vunpack.c.h.b16 %v1749
          %v1817 = vunpack.c.l.b16 %v1750
          %v1818 = vunpack.c.h.b16 %v1750
          %v1819 = vunpack.c.l.b16 %v1751
          %v1820 = vunpack.c.h.b16 %v1751
          %v1821 = vunpack.c.l.b16 %v1752
          %v1822 = vunpack.c.h.b16 %v1752
          %v1823 = vunpack.c.l.b16 %v1753
          %v1824 = vunpack.c.h.b16 %v1753
          %v1825 = vunpack.c.l.b16 %v1754
          %v1826 = vunpack.c.h.b16 %v1754
          %v1827 = vunpack.c.l.b16 %v1755
          %v1828 = vunpack.c.h.b16 %v1755
          %v1829 = vunpack.c.l.b16 %v1756
          %v1830 = vunpack.c.h.b16 %v1756
          %v1831 = vunpack.c.l.b16 %v1757
          %v1832 = vunpack.c.h.b16 %v1757
          %v1833 = vunpack.c.l.b16 %v1758
          %v1834 = vunpack.c.h.b16 %v1758
          %v1835 = vunpack.c.l.b16 %v1759
          %v1836 = vunpack.c.h.b16 %v1759
          %v1837 = vunpack.c.l.b16 %v1760
          %v1838 = vunpack.c.h.b16 %v1760
          %v1839 = vunpack.c.l.b16 %v1761
          %v1840 = vunpack.c.h.b16 %v1761
          %v1841 = vunpack.c.l.b16 %v1762
          %v1842 = vunpack.c.h.b16 %v1762
          %v1843 = vunpack.c.l.b16 %v1763
          %v1844 = vunpack.c.h.b16 %v1763
          %v1845 = vunpack.c.l.b16 %v1764
          %v1846 = vunpack.c.h.b16 %v1764
          %v1847 = vunpack.c.l.b16 %v1765
          %v1848 = vunpack.c.h.b16 %v1765
          %v1849 = vunpack.c.l.b16 %v1766
          %v1850 = vunpack.c.h.b16 %v1766
          %v1851 = vunpack.c.l.b16 %v1767
          %v1852 = vunpack.c.h.b16 %v1767
          %v1853 = vunpack.c.l.b16 %v1768
          %v1854 = vunpack.c.h.b16 %v1768
          %v1855 = vunpack.c.l.b16 %v1769
          %v1856 = vunpack.c.h.b16 %v1769
          %v1857 = vunpack.c.l.b16 %v1770
          %v1858 = vunpack.c.h.b16 %v1770
          %v1859 = vunpack.c.l.b16 %v1771
          %v1860 = vunpack.c.h.b16 %v1771
          %v1861 = vunpack.c.l.b16 %v1772
          %v1862 = vunpack.c.h.b16 %v1772
          %v1863 = vunpack.c.l.b16 %v1773
          %v1864 = vunpack.c.h.b16 %v1773
          %v1865 = vunpack.c.l.b16 %v1774
          %v1866 = vunpack.c.h.b16 %v1774
          %v1867 = vunpack.c.l.b16 %v1775
          %v1868 = vunpack.c.h.b16 %v1775
          %v1869 = vunpack.c.l.b16 %v1776
          %v1870 = vunpack.c.h.b16 %v1776
          %v1871 = vunpack.c.l.b16 %v1777
          %v1872 = vunpack.c.h.b16 %v1777
          %v1873 = vunpack.c.l.b16 %v1778
          %v1874 = vunpack.c.h.b16 %v1778
          %v1875 = vpack.c.b16 %v1811, %v1811
          %v1876 = vpack.c.b16 %v1812, %v1812
          %v1877 = vpack.c.b16 %v1813, %v1813
          %v1878 = vpack.c.b16 %v1814, %v1814
          %v1879 = vpack.c.b16 %v1815, %v1815
          %v1880 = vpack.c.b16 %v1816, %v1816
          %v1881 = vpack.c.b16 %v1817, %v1817
          %v1882 = vpack.c.b16 %v1818, %v1818
          %v1883 = vpack.c.b16 %v1819, %v1819
          %v1884 = vpack.c.b16 %v1820, %v1820
          %v1885 = vpack.c.b16 %v1821, %v1821
          %v1886 = vpack.c.b16 %v1822, %v1822
          %v1887 = vpack.c.b16 %v1823, %v1823
          %v1888 = vpack.c.b16 %v1824, %v1824
          %v1889 = vpack.c.b16 %v1825, %v1825
          %v1890 = vpack.c.b16 %v1826, %v1826
          %v1891 = vpack.c.b16 %v1827, %v1827
          %v1892 = vpack.c.b16 %v1828, %v1828
          %v1893 = vpack.c.b16 %v1829, %v1829
          %v1894 = vpack.c.b16 %v1830, %v1830
          %v1895 = vpack.c.b16 %v1831, %v1831
          %v1896 = vpack.c.b16 %v1832, %v1832
          %v1897 = vpack.c.b16 %v1833, %v1833
          %v1898 = vpack.c.b16 %v1834, %v1834
          %v1899 = vpack.c.b16 %v1835, %v1835
          %v1900 = vpack.c.b16 %v1836, %v1836
          %v1901 = vpack.c.b16 %v1837, %v1837
          %v1902 = vpack.c.b16 %v1838, %v1838
          %v1903 = vpack.c.b16 %v1839, %v1839
          %v1904 = vpack.c.b16 %v1840, %v1840
          %v1905 = vpack.c.b16 %v1841, %v1841
          %v1906 = vpack.c.b16 %v1842, %v1842
          %v1907 = vpack.c.b16 %v1843, %v1843
          %v1908 = vpack.c.b16 %v1844, %v1844
          %v1909 = vpack.c.b16 %v1845, %v1845
          %v1910 = vpack.c.b16 %v1846, %v1846
          %v1911 = vpack.c.b16 %v1847, %v1847
          %v1912 = vpack.c.b16 %v1848, %v1848
          %v1913 = vpack.c.b16 %v1849, %v1849
          %v1914 = vpack.c.b16 %v1850, %v1850
          %v1915 = vpack.c.b16 %v1851, %v1851
          %v1916 = vpack.c.b16 %v1852, %v1852
          %v1917 = vpack.c.b16 %v1853, %v1853
          %v1918 = vpack.c.b16 %v1854, %v1854
          %v1919 = vpack.c.b16 %v1855, %v1855
          %v1920 = vpack.c.b16 %v1856, %v1856
          %v1921 = vpack.c.b16 %v1857, %v1857
          %v1922 = vpack.c.b16 %v1858, %v1858
          %v1923 = vpack.c.b16 %v1859, %v1859
          %v1924 = vpack.c.b16 %v1860, %v1860
          %v1925 = vpack.c.b16 %v1861, %v1861
          %v1926 = vpack.c.b16 %v1862, %v1862
          %v1927 = vpack.c.b16 %v1863, %v1863
          %v1928 = vpack.c.b16 %v1864, %v1864
          %v1929 = vpack.c.b16 %v1865, %v1865
          %v1930 = vpack.c.b16 %v1866, %v1866
          %v1931 = vpack.c.b16 %v1867, %v1867
          %v1932 = vpack.c.b16 %v1868, %v1868
          %v1933 = vpack.c.b16 %v1869, %v1869
          %v1934 = vpack.c.b16 %v1870, %v1870
          %v1935 = vpack.c.b16 %v1871, %v1871
          %v1936 = vpack.c.b16 %v1872, %v1872
          %v1937 = vpack.c.b16 %v1873, %v1873
          %v1938 = vpack.c.b16 %v1874, %v1874
          %2003 = vst [vmem:[%s327] sm:$0xf] %v1875
          %2004 = vst [vmem:[%s327 + $0x4] sm:$0xf] %v1876
          %2005 = vst [vmem:[%s327 + $0x8] sm:$0xf] %v1877
          %2006 = vst [vmem:[%s327 + $0xc] sm:$0xf] %v1878
          %2007 = vst [vmem:[%s327 + $0x10] sm:$0xf] %v1879
          %2008 = vst [vmem:[%s327 + $0x14] sm:$0xf] %v1880
          %2009 = vst [vmem:[%s327 + $0x18] sm:$0xf] %v1881
          %2010 = vst [vmem:[%s327 + $0x1c] sm:$0xf] %v1882
          %2011 = vst [vmem:[%s327 + $0x20] sm:$0xf] %v1883
          %2012 = vst [vmem:[%s327 + $0x24] sm:$0xf] %v1884
          %2013 = vst [vmem:[%s327 + $0x28] sm:$0xf] %v1885
          %2014 = vst [vmem:[%s327 + $0x2c] sm:$0xf] %v1886
          %2015 = vst [vmem:[%s327 + $0x30] sm:$0xf] %v1887
          %2016 = vst [vmem:[%s327 + $0x34] sm:$0xf] %v1888
          %2017 = vst [vmem:[%s327 + $0x38] sm:$0xf] %v1889
          %2018 = vst [vmem:[%s327 + $0x3c] sm:$0xf] %v1890
          %2019 = vst [vmem:[%s327 + $0x40] sm:$0xf] %v1891
          %2020 = vst [vmem:[%s327 + $0x44] sm:$0xf] %v1892
          %2021 = vst [vmem:[%s327 + $0x48] sm:$0xf] %v1893
          %2022 = vst [vmem:[%s327 + $0x4c] sm:$0xf] %v1894
          %2023 = vst [vmem:[%s327 + $0x50] sm:$0xf] %v1895
          %2024 = vst [vmem:[%s327 + $0x54] sm:$0xf] %v1896
          %2025 = vst [vmem:[%s327 + $0x58] sm:$0xf] %v1897
          %2026 = vst [vmem:[%s327 + $0x5c] sm:$0xf] %v1898
          %2027 = vst [vmem:[%s327 + $0x60] sm:$0xf] %v1899
          %2028 = vst [vmem:[%s327 + $0x64] sm:$0xf] %v1900
          %2029 = vst [vmem:[%s327 + $0x68] sm:$0xf] %v1901
          %2030 = vst [vmem:[%s327 + $0x6c] sm:$0xf] %v1902
          %2031 = vst [vmem:[%s327 + $0x70] sm:$0xf] %v1903
          %2032 = vst [vmem:[%s327 + $0x74] sm:$0xf] %v1904
          %2033 = vst [vmem:[%s327 + $0x78] sm:$0xf] %v1905
          %2034 = vst [vmem:[%s327 + $0x7c] sm:$0xf] %v1906
          %2035 = vst [vmem:[%s327 + $0x80] sm:$0xf] %v1907
          %2036 = vst [vmem:[%s327 + $0x84] sm:$0xf] %v1908
          %2037 = vst [vmem:[%s327 + $0x88] sm:$0xf] %v1909
          %2038 = vst [vmem:[%s327 + $0x8c] sm:$0xf] %v1910
          %2039 = vst [vmem:[%s327 + $0x90] sm:$0xf] %v1911
          %2040 = vst [vmem:[%s327 + $0x94] sm:$0xf] %v1912
          %2041 = vst [vmem:[%s327 + $0x98] sm:$0xf] %v1913
          %2042 = vst [vmem:[%s327 + $0x9c] sm:$0xf] %v1914
          %2043 = vst [vmem:[%s327 + $0xa0] sm:$0xf] %v1915
          %2044 = vst [vmem:[%s327 + $0xa4] sm:$0xf] %v1916
          %2045 = vst [vmem:[%s327 + $0xa8] sm:$0xf] %v1917
          %2046 = vst [vmem:[%s327 + $0xac] sm:$0xf] %v1918
          %2047 = vst [vmem:[%s327 + $0xb0] sm:$0xf] %v1919
          %2048 = vst [vmem:[%s327 + $0xb4] sm:$0xf] %v1920
          %2049 = vst [vmem:[%s327 + $0xb8] sm:$0xf] %v1921
          %2050 = vst [vmem:[%s327 + $0xbc] sm:$0xf] %v1922
          %2051 = vst [vmem:[%s327 + $0xc0] sm:$0xf] %v1923
          %2052 = vst [vmem:[%s327 + $0xc4] sm:$0xf] %v1924
          %2053 = vst [vmem:[%s327 + $0xc8] sm:$0xf] %v1925
          %2054 = vst [vmem:[%s327 + $0xcc] sm:$0xf] %v1926
          %2055 = vst [vmem:[%s327 + $0xd0] sm:$0xf] %v1927
          %2056 = vst [vmem:[%s327 + $0xd4] sm:$0xf] %v1928
          %2057 = vst [vmem:[%s327 + $0xd8] sm:$0xf] %v1929
          %2058 = vst [vmem:[%s327 + $0xdc] sm:$0xf] %v1930
          %2059 = vst [vmem:[%s327 + $0xe0] sm:$0xf] %v1931
          %2060 = vst [vmem:[%s327 + $0xe4] sm:$0xf] %v1932
          %2061 = vst [vmem:[%s327 + $0xe8] sm:$0xf] %v1933
          %2062 = vst [vmem:[%s327 + $0xec] sm:$0xf] %v1934
          %2063 = vst [vmem:[%s327 + $0xf0] sm:$0xf] %v1935
          %2064 = vst [vmem:[%s327 + $0xf4] sm:$0xf] %v1936
          %2065 = vst [vmem:[%s327 + $0xf8] sm:$0xf] %v1937
          %2066 = vst [vmem:[%s327 + $0xfc] sm:$0xf] %v1938
        $region56: #{tpu_custom_call.1} parent=39 // pred_fallthru
          _
        %s2067 = sand.u32 %s186, 1
        %s2068 = scalar_lea.sflag [#allocation5], %s2067
        %s2069 = sand.u32 %s186, 1
        %s2070 = smul.addr %s2069, 256
        %s2071 = scalar_lea.vmem [#allocation8], %s2070
        // Predicated region
        $region57: #{tpu_custom_call.1} parent=39 // pred_check
          %p2072 = pneg %p196
        $region58: #{tpu_custom_call.1} parent=39 // pred_check_branch
          %2074 = sbr.rel (%p2072) target = $region60
        $region59: #{tpu_custom_call.1} parent=39 // pred_region
          %s2075 = smul.u32 64, %s28
          %s2077 = ssub.s32 4096, 4096
          %2078 = vsyncadd %s2068, %s2077
          %s2079 = sadd.s32 %s29, %s2075
          %s2080 = smul.addr %s2079, 64
          %s2081 = scalar_lea.hbm %s5, %s2080
          %s2082 = sshll.u32 %s2071, 4
          %s2083 = int_to_ptr.vmem [resolvable:$true] %s2082
          %2088 = dma.vmem_to_hbm [thread:$0]  %s2083, 4096, %s2081, %s2068, 64, 64, 4
        $region60: #{tpu_custom_call.1} parent=39 // pred_fallthru
          _
      $region40: #{tpu_custom_call.1} parent=5 // pred_fallthru
        _
      %p2089 = scmp.le.s32.totalorder 2, %s18
      // Predicated region
      $region61: #{tpu_custom_call.1} parent=5 // pred_check
        %p2090 = pneg %p2089
      $region62: #{tpu_custom_call.1} parent=5 // pred_check_branch
        %2092 = sbr.rel (%p2090) target = $region64
      $region63: #{tpu_custom_call.1} parent=5 // pred_region
        %s2093 = ssub.s32 %s18, 2
        // Predicated region
        $region65: #{tpu_custom_call.1} parent=63 // pred_check
          %p2094 = pneg %p202
        $region66: #{tpu_custom_call.1} parent=63 // pred_check_branch
          %2096 = sbr.rel (%p2094) target = $region68
        $region67: #{tpu_custom_call.1} parent=63 // pred_region
          %s2097 = sand.u32 %s187, 1
          %s2098 = scalar_lea.sflag [#allocation5], %s2097
          %s2099 = sand.u32 %s187, 1
          %s2100 = smul.addr %s2099, 256
          %s2101 = scalar_lea.vmem [#allocation8], %s2100
          %2102 = dma.done %s2098, 4096
        $region68: #{tpu_custom_call.1} parent=63 // pred_fallthru
          _
      $region64: #{tpu_custom_call.1} parent=5 // pred_fallthru
        _
    $region6: #{tpu_custom_call.1} parent=1 // loop_footer
      %s22 = sadd.s32 1, %s18
    $region7: #{tpu_custom_call.1} parent=1 // loop_footer_branch
      %17 = sbr.rel target = $region3
    $region8: #{tpu_custom_call.1} parent=1 // loop_exit
      _
    %2103 = vsyncpa [#allocation4], 1
    %s2104 = scalar_lea.sflag [#allocation4], 1
    %2105 = vsyncpa %s2104, 1
    %2106 = vsyncpa [#allocation7], 1
    %2107 = vsyncpa [#allocation5], 1
    %s2108 = scalar_lea.sflag [#allocation5], 1
    %2109 = vsyncpa %s2108, 1

</llo_original>
